<compile_context>
chip_gen: v7x
topology: tpu7x:2x2x1
jax: 0.10.0
libtpu: 0.0.40
codegen_flags: <defaults>
</compile_context>

<pallas_src>
import functools
import numpy as np
import jax
import jax.numpy as jnp
from jax.experimental import pallas as pl
from jax.experimental.pallas import tpu as pltpu


# ----------------------------------------------------------------------------
# Support-matrix construction (NumPy glue, mirrors calculate_scaled_laplacian)
# ----------------------------------------------------------------------------
def scaled_laplacian(adj, lambda_max=None):
    """Dense equivalent of calculate_scaled_laplacian(adj, lambda_max=None)."""
    A = np.maximum(adj, adj.T)                       # undirected=True
    d = A.sum(1)
    with np.errstate(divide="ignore"):
        d_inv_sqrt = np.power(d, -0.5)
    d_inv_sqrt[np.isinf(d_inv_sqrt)] = 0.0
    L = np.eye(A.shape[0]) - (A * d_inv_sqrt[None, :]) * d_inv_sqrt[:, None]
    if lambda_max is None:
        lambda_max = float(np.linalg.eigvalsh(L).max())
    return (2.0 / lambda_max) * L - np.eye(A.shape[0])


# ----------------------------------------------------------------------------
# Pallas kernel: full DCGRU cell forward for one batch block
# ----------------------------------------------------------------------------
def _dcgru_kernel(x_ref, h_ref, s_ref,
                  wxr_ref, whr_ref, wxu_ref, whu_ref, wxc_ref, whc_ref,
                  br_ref, bu_ref, bc_ref, out_ref):
    f32 = jnp.float32
    bb, N, Din = x_ref.shape
    U = h_ref.shape[-1]
    M = wxr_ref.shape[0]                 # number of diffusion matrices = K + 1
    cd = s_ref.dtype                     # MXU operand dtype (bf16 or f32)

    S = s_ref[...]                       # (N, N)        cd
    x3 = x_ref[...]                      # (bb, N, Din)  cd
    h3 = h_ref[...].astype(f32)          # (bb, N, U)    f32 (state kept in f32)

    # -------- layout helpers (2-D dots / major reshapes / static slices only) ----
    def to_diff(v3):
        # (bb, N, C) -> diffusion layout (N, bb*C); columns ordered batch-major.
        if bb == 1:
            return v3[0]
        return jnp.concatenate([v3[b] for b in range(bb)], axis=1)

    def to_feat(t, C):
        # diffusion layout (N, bb*C) -> feature layout (bb*N, C); rows batch-major.
        if bb == 1:
            return t
        return jnp.concatenate([t[:, b * C:(b + 1) * C] for b in range(bb)], axis=0)

    def diffuse(v3, C):
        """Chebyshev terms T_m(S)·v, m = 0..K, in feature layout (bb*N, C),
        already cast to the compute dtype exactly once.

        Each diffusion step is ONE (N,N) x (N, bb*C) matmul.  The recursion
        (2*S·x_k - x_{k-1}) carry is kept in f32; only MXU operands are cast."""
        terms = [v3.reshape(bb * N, C).astype(cd)]             # T_0 (identity)
        if M > 1:
            v0 = to_diff(v3).astype(f32)                       # (N, bb*C) f32 carry
            v1 = jnp.dot(S, v0.astype(cd), preferred_element_type=f32)
            terms.append(to_feat(v1, C).astype(cd))
            vk1, vk0 = v1, v0
            for _ in range(2, M):
                v2 = 2.0 * jnp.dot(S, vk1.astype(cd), preferred_element_type=f32) - vk0
                terms.append(to_feat(v2, C).astype(cd))
                vk1, vk0 = v2, vk1
        return terms

    def gconv(xd, hd, wx_ref, wh_ref, b_ref):
        """sum_m xd[m] @ Wx[m] + hd[m] @ Wh[m] + b  -- per-term f32 accumulation.
        Operands arrive pre-cast to the compute dtype (no per-call re-casts)."""
        acc = b_ref[...].astype(f32)                           # (1, out) broadcast-add
        for m in range(M):
            acc = acc + jnp.dot(xd[m], wx_ref[m], preferred_element_type=f32)
            acc = acc + jnp.dot(hd[m], wh_ref[m], preferred_element_type=f32)
        return acc                                             # (bb*N, out) f32

    # Diffusion of the input is shared between the gate and candidate paths.
    xd = diffuse(x3, Din)                                      # M x (bb*N, Din) cd
    hd = diffuse(h3, U)                                        # M x (bb*N, U)   cd

    # Gate path: r / u come out of separate weight columns (no lane slicing).
    r = jax.nn.sigmoid(gconv(xd, hd, wxr_ref, whr_ref, br_ref))   # (bb*N, U) f32
    u = jax.nn.sigmoid(gconv(xd, hd, wxu_ref, whu_ref, bu_ref))   # (bb*N, U) f32

    # Candidate path: only r*h needs re-diffusion.
    h_feat = h3.reshape(bb * N, U)
    rhd = diffuse((r * h_feat).reshape(bb, N, U), U)
    c = jnp.tanh(gconv(xd, rhd, wxc_ref, whc_ref, bc_ref))        # (bb*N, U) f32

    # GRU blend (f32), written back batch-major.
    new_h = u * h_feat + (1.0 - u) * c
    out_ref[...] = new_h.reshape(bb, N, U).astype(out_ref.dtype)


# ----------------------------------------------------------------------------
# One-time parameter preparation (hoisted out of the per-timestep path)
# ----------------------------------------------------------------------------
def prepare_dcgru_params(support, w_gate, b_gate, w_cand, b_cand,
                         input_dim, num_units, max_diffusion_step,
                         compute_dtype=jnp.bfloat16):
    """Permute torch-layout weights (row index f*M + m -> (M, F, out)), split the
    x/h rows and the r/u gate columns, and cast MXU operands to compute_dtype."""
    Din, U, K = input_dim, num_units, max_diffusion_step
    F = Din + U
    M = K + 1                                   # single ('laplacian') support

    def split_weight(w):
        wp = jnp.asarray(w, jnp.float32).reshape(F, M, -1).transpose(1, 0, 2)
        return wp[:, :Din, :], wp[:, Din:, :]   # x-rows, h-rows

    wx_g, wh_g = split_weight(w_gate)           # (M, Din, 2U), (M, U, 2U)
    wx_c, wh_c = split_weight(w_cand)           # (M, Din, U),  (M, U, U)
    bg = jnp.asarray(b_gate, jnp.float32)
    cast = lambda a: a.astype(compute_dtype)
    return dict(
        S=cast(jnp.asarray(support, jnp.float32)),
        Wxr=cast(wx_g[..., :U]), Whr=cast(wh_g[..., :U]),
        Wxu=cast(wx_g[..., U:]), Whu=cast(wh_g[..., U:]),
        Wxc=cast(wx_c), Whc=cast(wh_c),
        br=bg[:U].reshape(1, U), bu=bg[U:].reshape(1, U),
        bc=jnp.asarray(b_cand, jnp.float32).reshape(1, U),
    )


# ----------------------------------------------------------------------------
# Per-timestep forward (jit'd; cheap reshapes + one pallas_call)
# ----------------------------------------------------------------------------
@functools.partial(jax.jit, static_argnames=("num_nodes", "num_units",
                                             "max_diffusion_step", "batch_block"))
def dcgru_cell_forward(inputs, state, params, *, num_nodes, num_units,
                       max_diffusion_step, batch_block=None):
    B = inputs.shape[0]
    N, U = num_nodes, num_units
    Din = inputs.shape[1] // N
    assert params["Wxr"].shape[0] == max_diffusion_step + 1
    cd = params["S"].dtype

    bb = B if batch_block is None else batch_block
    assert B % bb == 0
    G = B // bb

    x3 = inputs.reshape(B, N, Din).astype(cd)          # halve input DMA for bf16
    h3 = state.reshape(B, N, U).astype(jnp.float32)    # state stays f32

    batched = lambda shp: pl.BlockSpec((bb,) + shp, lambda g: (g, 0, 0))
    shared = lambda arr: pl.BlockSpec(arr.shape, lambda g, nd=arr.ndim: (0,) * nd)

    new_h3 = pl.pallas_call(
        _dcgru_kernel,
        out_shape=jax.ShapeDtypeStruct((B, N, U), jnp.float32),
        grid=(G,),
        in_specs=[
            batched((N, Din)),                       # x
            batched((N, U)),                         # h (aliased with the output)
            shared(params["S"]),
            shared(params["Wxr"]), shared(params["Whr"]),
            shared(params["Wxu"]), shared(params["Whu"]),
            shared(params["Wxc"]), shared(params["Whc"]),
            shared(params["br"]), shared(params["bu"]), shared(params["bc"]),
        ],
        out_specs=batched((N, U)),
        input_output_aliases={1: 0},                 # reuse the state buffer
        compiler_params=pltpu.CompilerParams(
            dimension_semantics=("parallel",),       # batch blocks across TCs (v7x)
            vmem_limit_bytes=48 * 1024 * 1024),
    )(x3, h3, params["S"],
      params["Wxr"], params["Whr"], params["Wxu"], params["Whu"],
      params["Wxc"], params["Whc"], params["br"], params["bu"], params["bc"])

    new_state = new_h3.reshape(B, N * U)             # free row-major flatten
    # TODO(synk): optional num_proj Linear output head not implemented (num_proj=None).
    return new_state, new_state


# ----------------------------------------------------------------------------
# Pure-JAX reference mirroring the PyTorch code path (for verification)
# ----------------------------------------------------------------------------
def _dcgru_ref(inputs, state, support, w_gate, b_gate, w_cand, b_cand, N, U, K):
    B = inputs.shape[0]

    def gconv(inp, st, W, b, out_dim):
        x = jnp.concatenate([inp.reshape(B, N, -1), st.reshape(B, N, -1)], axis=2)
        F = x.shape[2]
        x0 = jnp.transpose(x, (1, 2, 0)).reshape(N, F * B)
        xs = [x0]
        x1 = support @ x0
        xs.append(x1)
        xk1, xk0 = x1, x0
        for _ in range(2, K + 1):
            x2 = 2.0 * (support @ xk1) - xk0
            xs.append(x2)
            xk1, xk0 = x2, xk1
        M = len(xs)
        xst = jnp.stack(xs, 0).reshape(M, N, F, B)
        xst = jnp.transpose(xst, (3, 1, 2, 0)).reshape(B * N, F * M)
        return (xst @ W + b).reshape(B, N * out_dim)

    ru = jax.nn.sigmoid(gconv(inputs, state, w_gate, b_gate, 2 * U)).reshape(B, N, 2 * U)
    r = ru[..., :U].reshape(B, N * U)
    u = ru[..., U:].reshape(B, N * U)
    c = jnp.tanh(gconv(inputs, r * state, w_cand, b_cand, U))
    return u * state + (1.0 - u) * c


# ----------------------------------------------------------------------------
if __name__ == "__main__":
    B, N, Din, U, K = 2, 16, 4, 32, 2
    F = Din + U
    M = 1 * K + 1

    key = jax.random.PRNGKey(0)
    k_adj, k_x, k_h, k_wg, k_wc = jax.random.split(key, 5)

    # deterministic adjacency -> dense scaled laplacian support
    adj = np.asarray(jax.random.uniform(k_adj, (N, N)), dtype=np.float64)
    adj = adj * (adj > 0.4)
    np.fill_diagonal(adj, 0.0)
    support = jnp.asarray(scaled_laplacian(adj, lambda_max=None), dtype=jnp.float32)

    # deterministic xavier-normal weights (gain=1.414), zero biases (bias_start=0.0)
    def xavier_normal(k, shape, gain=1.414):
        std = gain * np.sqrt(2.0 / (shape[0] + shape[1]))
        return jax.random.normal(k, shape, dtype=jnp.float32) * std

    w_gate = xavier_normal(k_wg, (F * M, 2 * U))
    b_gate = jnp.zeros((2 * U,), jnp.float32)
    w_cand = xavier_normal(k_wc, (F * M, U))
    b_cand = jnp.zeros((U,), jnp.float32)

    inputs = jax.random.normal(k_x, (B, N * Din), dtype=jnp.float32)
    state = jax.random.normal(k_h, (B, N * U), dtype=jnp.float32)

    ref = np.asarray(_dcgru_ref(inputs, state, support, w_gate, b_gate,
                                w_cand, b_cand, N, U, K), dtype=np.float64)

    # --- f32 config, whole batch in one block: tight elementwise check -----------
    params_f32 = prepare_dcgru_params(support, w_gate, b_gate, w_cand, b_cand,
                                      Din, U, K, compute_dtype=jnp.float32)
    out32, new32 = dcgru_cell_forward(inputs, state, params_f32,
                                      num_nodes=N, num_units=U,
                                      max_diffusion_step=K, batch_block=B)
    jax.block_until_ready(new32)
    np.testing.assert_allclose(np.asarray(new32), ref, rtol=1e-4, atol=1e-4)

    # --- bf16 config, batch-gridded (megacore path): bf16-level aggregate check --
    params_bf16 = prepare_dcgru_params(support, w_gate, b_gate, w_cand, b_cand,
                                       Din, U, K, compute_dtype=jnp.bfloat16)
    out16, new16 = dcgru_cell_forward(inputs, state, params_bf16,
                                      num_nodes=N, num_units=U,
                                      max_diffusion_step=K, batch_block=1)
    jax.block_until_ready(new16)
    rel_rms = (np.linalg.norm(np.asarray(new16, dtype=np.float64) - ref)
               / np.linalg.norm(ref))
    assert rel_rms < 5e-2, f"bf16 kernel rel RMS error too high: {rel_rms}"

    print("KERNEL_OK")
</pallas_src>

<mosaic_0001>
module attributes {stable_mosaic.version = 11 : i64} {
  func.func @_dcgru_kernel(%arg0: i32, %arg1: memref<2x16x4xf32, #tpu.memory_space<vmem>>, %arg2: memref<2x16x32xf32, #tpu.memory_space<vmem>>, %arg3: memref<16x16xf32, #tpu.memory_space<vmem>>, %arg4: memref<3x4x32xf32, #tpu.memory_space<vmem>>, %arg5: memref<3x32x32xf32, #tpu.memory_space<vmem>>, %arg6: memref<3x4x32xf32, #tpu.memory_space<vmem>>, %arg7: memref<3x32x32xf32, #tpu.memory_space<vmem>>, %arg8: memref<3x4x32xf32, #tpu.memory_space<vmem>>, %arg9: memref<3x32x32xf32, #tpu.memory_space<vmem>>, %arg10: memref<1x32xf32, #tpu.memory_space<vmem>>, %arg11: memref<1x32xf32, #tpu.memory_space<vmem>>, %arg12: memref<1x32xf32, #tpu.memory_space<vmem>>, %arg13: memref<2x16x32xf32, #tpu.memory_space<vmem>>) attributes {dimension_semantics = [#tpu.dimension_semantics<parallel>], iteration_bounds = array<i64: 1>, scalar_prefetch = 0 : i64, scratch_operands = 0 : i64, tpu.core_type = #tpu.core_type<tc>, window_params = [{transform_indices = @transform_0, window_bounds = array<i64: 2, 16, 4>}, {transform_indices = @transform_1, window_bounds = array<i64: 2, 16, 32>}, {pipeline_mode = #tpu.pipeline_mode<synchronous>, transform_indices = @transform_2, window_bounds = array<i64: 16, 16>}, {pipeline_mode = #tpu.pipeline_mode<synchronous>, transform_indices = @transform_3, window_bounds = array<i64: 3, 4, 32>}, {pipeline_mode = #tpu.pipeline_mode<synchronous>, transform_indices = @transform_4, window_bounds = array<i64: 3, 32, 32>}, {pipeline_mode = #tpu.pipeline_mode<synchronous>, transform_indices = @transform_5, window_bounds = array<i64: 3, 4, 32>}, {pipeline_mode = #tpu.pipeline_mode<synchronous>, transform_indices = @transform_6, window_bounds = array<i64: 3, 32, 32>}, {pipeline_mode = #tpu.pipeline_mode<synchronous>, transform_indices = @transform_7, window_bounds = array<i64: 3, 4, 32>}, {pipeline_mode = #tpu.pipeline_mode<synchronous>, transform_indices = @transform_8, window_bounds = array<i64: 3, 32, 32>}, {pipeline_mode = #tpu.pipeline_mode<synchronous>, transform_indices = @transform_9, window_bounds = array<i64: 1, 32>}, {pipeline_mode = #tpu.pipeline_mode<synchronous>, transform_indices = @transform_10, window_bounds = array<i64: 1, 32>}, {pipeline_mode = #tpu.pipeline_mode<synchronous>, transform_indices = @transform_11, window_bounds = array<i64: 1, 32>}, {transform_indices = @transform_12, window_bounds = array<i64: 2, 16, 32>}]} {
    %c0 = arith.constant 0 : index
    %c0_0 = arith.constant 0 : index
    %0 = vector.load %arg3[%c0, %c0_0] : memref<16x16xf32, #tpu.memory_space<vmem>>, vector<16x16xf32>
    %c0_1 = arith.constant 0 : index
    %c0_2 = arith.constant 0 : index
    %c0_3 = arith.constant 0 : index
    %1 = vector.load %arg1[%c0_1, %c0_2, %c0_3] : memref<2x16x4xf32, #tpu.memory_space<vmem>>, vector<2x16x4xf32>
    %c0_4 = arith.constant 0 : index
    %c0_5 = arith.constant 0 : index
    %c0_6 = arith.constant 0 : index
    %2 = vector.load %arg2[%c0_4, %c0_5, %c0_6] : memref<2x16x32xf32, #tpu.memory_space<vmem>>, vector<2x16x32xf32>
    %3 = vector.shape_cast %1 : vector<2x16x4xf32> to vector<32x4xf32>
    %4 = vector.extract_strided_slice %1 {offsets = [0, 0, 0], sizes = [1, 16, 4], strides = [1, 1, 1]} : vector<2x16x4xf32> to vector<1x16x4xf32>
    %5 = vector.shape_cast %4 : vector<1x16x4xf32> to vector<16x4xf32>
    %6 = vector.extract_strided_slice %1 {offsets = [1, 0, 0], sizes = [1, 16, 4], strides = [1, 1, 1]} : vector<2x16x4xf32> to vector<1x16x4xf32>
    %7 = vector.shape_cast %6 : vector<1x16x4xf32> to vector<16x4xf32>
    %8 = tpu.concatenate %5, %7 in 1 : vector<16x4xf32>, vector<16x4xf32> -> vector<16x8xf32>
    %cst = arith.constant dense<0.000000e+00> : vector<16x8xf32>
    %9 = tpu.matmul %0, %8, %cst {dimension_numbers = #tpu.dot_dimension_numbers<[1], [0], [0], [1], [0, 0, 1, 1], [], []>} : vector<16x16xf32>, vector<16x8xf32>, vector<16x8xf32> -> vector<16x8xf32>
    %10 = vector.extract_strided_slice %9 {offsets = [0, 0], sizes = [16, 4], strides = [1, 1]} : vector<16x8xf32> to vector<16x4xf32>
    %11 = vector.extract_strided_slice %9 {offsets = [0, 4], sizes = [16, 4], strides = [1, 1]} : vector<16x8xf32> to vector<16x4xf32>
    %12 = tpu.concatenate %10, %11 in 0 : vector<16x4xf32>, vector<16x4xf32> -> vector<32x4xf32>
    %cst_7 = arith.constant dense<0.000000e+00> : vector<16x8xf32>
    %13 = tpu.matmul %0, %9, %cst_7 {dimension_numbers = #tpu.dot_dimension_numbers<[1], [0], [0], [1], [0, 0, 1, 1], [], []>} : vector<16x16xf32>, vector<16x8xf32>, vector<16x8xf32> -> vector<16x8xf32>
    %cst_8 = arith.constant 2.000000e+00 : f32
    %14 = vector.broadcast %cst_8 : f32 to vector<16x8xf32>
    %15 = arith.mulf %14, %13 : vector<16x8xf32>
    %16 = arith.subf %15, %8 : vector<16x8xf32>
    %17 = vector.extract_strided_slice %16 {offsets = [0, 0], sizes = [16, 4], strides = [1, 1]} : vector<16x8xf32> to vector<16x4xf32>
    %18 = vector.extract_strided_slice %16 {offsets = [0, 4], sizes = [16, 4], strides = [1, 1]} : vector<16x8xf32> to vector<16x4xf32>
    %19 = tpu.concatenate %17, %18 in 0 : vector<16x4xf32>, vector<16x4xf32> -> vector<32x4xf32>
    %20 = vector.shape_cast %2 : vector<2x16x32xf32> to vector<32x32xf32>
    %21 = vector.extract_strided_slice %2 {offsets = [0, 0, 0], sizes = [1, 16, 32], strides = [1, 1, 1]} : vector<2x16x32xf32> to vector<1x16x32xf32>
    %22 = vector.shape_cast %21 : vector<1x16x32xf32> to vector<16x32xf32>
    %23 = vector.extract_strided_slice %2 {offsets = [1, 0, 0], sizes = [1, 16, 32], strides = [1, 1, 1]} : vector<2x16x32xf32> to vector<1x16x32xf32>
    %24 = vector.shape_cast %23 : vector<1x16x32xf32> to vector<16x32xf32>
    %25 = tpu.concatenate %22, %24 in 1 : vector<16x32xf32>, vector<16x32xf32> -> vector<16x64xf32>
    %cst_9 = arith.constant dense<0.000000e+00> : vector<16x64xf32>
    %26 = tpu.matmul %0, %25, %cst_9 {dimension_numbers = #tpu.dot_dimension_numbers<[1], [0], [0], [1], [0, 0, 1, 1], [], []>} : vector<16x16xf32>, vector<16x64xf32>, vector<16x64xf32> -> vector<16x64xf32>
    %27 = vector.extract_strided_slice %26 {offsets = [0, 0], sizes = [16, 32], strides = [1, 1]} : vector<16x64xf32> to vector<16x32xf32>
    %28 = vector.extract_strided_slice %26 {offsets = [0, 32], sizes = [16, 32], strides = [1, 1]} : vector<16x64xf32> to vector<16x32xf32>
    %29 = tpu.concatenate %27, %28 in 0 : vector<16x32xf32>, vector<16x32xf32> -> vector<32x32xf32>
    %cst_10 = arith.constant dense<0.000000e+00> : vector<16x64xf32>
    %30 = tpu.matmul %0, %26, %cst_10 {dimension_numbers = #tpu.dot_dimension_numbers<[1], [0], [0], [1], [0, 0, 1, 1], [], []>} : vector<16x16xf32>, vector<16x64xf32>, vector<16x64xf32> -> vector<16x64xf32>
    %cst_11 = arith.constant 2.000000e+00 : f32
    %31 = vector.broadcast %cst_11 : f32 to vector<16x64xf32>
    %32 = arith.mulf %31, %30 : vector<16x64xf32>
    %33 = arith.subf %32, %25 : vector<16x64xf32>
    %34 = vector.extract_strided_slice %33 {offsets = [0, 0], sizes = [16, 32], strides = [1, 1]} : vector<16x64xf32> to vector<16x32xf32>
    %35 = vector.extract_strided_slice %33 {offsets = [0, 32], sizes = [16, 32], strides = [1, 1]} : vector<16x64xf32> to vector<16x32xf32>
    %36 = tpu.concatenate %34, %35 in 0 : vector<16x32xf32>, vector<16x32xf32> -> vector<32x32xf32>
    %c0_12 = arith.constant 0 : index
    %c0_13 = arith.constant 0 : index
    %37 = vector.load %arg10[%c0_12, %c0_13] : memref<1x32xf32, #tpu.memory_space<vmem>>, vector<1x32xf32>
    %c0_14 = arith.constant 0 : index
    %c0_15 = arith.constant 0 : index
    %c0_16 = arith.constant 0 : index
    %38 = vector.load %arg4[%c0_14, %c0_15, %c0_16] : memref<3x4x32xf32, #tpu.memory_space<vmem>>, vector<1x4x32xf32>
    %39 = vector.shape_cast %38 : vector<1x4x32xf32> to vector<4x32xf32>
    %cst_17 = arith.constant dense<0.000000e+00> : vector<32x32xf32>
    %40 = tpu.matmul %3, %39, %cst_17 {dimension_numbers = #tpu.dot_dimension_numbers<[1], [0], [0], [1], [0, 0, 1, 1], [], []>} : vector<32x4xf32>, vector<4x32xf32>, vector<32x32xf32> -> vector<32x32xf32>
    %41 = vector.broadcast %37 : vector<1x32xf32> to vector<32x32xf32>
    %42 = arith.addf %41, %40 : vector<32x32xf32>
    %c0_18 = arith.constant 0 : index
    %c0_19 = arith.constant 0 : index
    %c0_20 = arith.constant 0 : index
    %43 = vector.load %arg5[%c0_18, %c0_19, %c0_20] : memref<3x32x32xf32, #tpu.memory_space<vmem>>, vector<1x32x32xf32>
    %44 = vector.shape_cast %43 : vector<1x32x32xf32> to vector<32x32xf32>
    %cst_21 = arith.constant dense<0.000000e+00> : vector<32x32xf32>
    %45 = tpu.matmul %20, %44, %cst_21 {dimension_numbers = #tpu.dot_dimension_numbers<[1], [0], [0], [1], [0, 0, 1, 1], [], []>} : vector<32x32xf32>, vector<32x32xf32>, vector<32x32xf32> -> vector<32x32xf32>
    %46 = arith.addf %42, %45 : vector<32x32xf32>
    %c1 = arith.constant 1 : index
    %c0_22 = arith.constant 0 : index
    %c0_23 = arith.constant 0 : index
    %47 = vector.load %arg4[%c1, %c0_22, %c0_23] : memref<3x4x32xf32, #tpu.memory_space<vmem>>, vector<1x4x32xf32>
    %48 = vector.shape_cast %47 : vector<1x4x32xf32> to vector<4x32xf32>
    %cst_24 = arith.constant dense<0.000000e+00> : vector<32x32xf32>
    %49 = tpu.matmul %12, %48, %cst_24 {dimension_numbers = #tpu.dot_dimension_numbers<[1], [0], [0], [1], [0, 0, 1, 1], [], []>} : vector<32x4xf32>, vector<4x32xf32>, vector<32x32xf32> -> vector<32x32xf32>
    %50 = arith.addf %46, %49 : vector<32x32xf32>
    %c1_25 = arith.constant 1 : index
    %c0_26 = arith.constant 0 : index
    %c0_27 = arith.constant 0 : index
    %51 = vector.load %arg5[%c1_25, %c0_26, %c0_27] : memref<3x32x32xf32, #tpu.memory_space<vmem>>, vector<1x32x32xf32>
    %52 = vector.shape_cast %51 : vector<1x32x32xf32> to vector<32x32xf32>
    %cst_28 = arith.constant dense<0.000000e+00> : vector<32x32xf32>
    %53 = tpu.matmul %29, %52, %cst_28 {dimension_numbers = #tpu.dot_dimension_numbers<[1], [0], [0], [1], [0, 0, 1, 1], [], []>} : vector<32x32xf32>, vector<32x32xf32>, vector<32x32xf32> -> vector<32x32xf32>
    %54 = arith.addf %50, %53 : vector<32x32xf32>
    %c2 = arith.constant 2 : index
    %c0_29 = arith.constant 0 : index
    %c0_30 = arith.constant 0 : index
    %55 = vector.load %arg4[%c2, %c0_29, %c0_30] : memref<3x4x32xf32, #tpu.memory_space<vmem>>, vector<1x4x32xf32>
    %56 = vector.shape_cast %55 : vector<1x4x32xf32> to vector<4x32xf32>
    %cst_31 = arith.constant dense<0.000000e+00> : vector<32x32xf32>
    %57 = tpu.matmul %19, %56, %cst_31 {dimension_numbers = #tpu.dot_dimension_numbers<[1], [0], [0], [1], [0, 0, 1, 1], [], []>} : vector<32x4xf32>, vector<4x32xf32>, vector<32x32xf32> -> vector<32x32xf32>
    %58 = arith.addf %54, %57 : vector<32x32xf32>
    %c2_32 = arith.constant 2 : index
    %c0_33 = arith.constant 0 : index
    %c0_34 = arith.constant 0 : index
    %59 = vector.load %arg5[%c2_32, %c0_33, %c0_34] : memref<3x32x32xf32, #tpu.memory_space<vmem>>, vector<1x32x32xf32>
    %60 = vector.shape_cast %59 : vector<1x32x32xf32> to vector<32x32xf32>
    %cst_35 = arith.constant dense<0.000000e+00> : vector<32x32xf32>
    %61 = tpu.matmul %36, %60, %cst_35 {dimension_numbers = #tpu.dot_dimension_numbers<[1], [0], [0], [1], [0, 0, 1, 1], [], []>} : vector<32x32xf32>, vector<32x32xf32>, vector<32x32xf32> -> vector<32x32xf32>
    %62 = arith.addf %58, %61 : vector<32x32xf32>
    %63 = arith.negf %62 : vector<32x32xf32>
    %64 = math.exp %63 : vector<32x32xf32>
    %cst_36 = arith.constant 1.000000e+00 : f32
    %65 = vector.broadcast %cst_36 : f32 to vector<32x32xf32>
    %66 = arith.addf %65, %64 : vector<32x32xf32>
    %67 = arith.divf %65, %66 : vector<32x32xf32>
    %c0_37 = arith.constant 0 : index
    %c0_38 = arith.constant 0 : index
    %68 = vector.load %arg11[%c0_37, %c0_38] : memref<1x32xf32, #tpu.memory_space<vmem>>, vector<1x32xf32>
    %c0_39 = arith.constant 0 : index
    %c0_40 = arith.constant 0 : index
    %c0_41 = arith.constant 0 : index
    %69 = vector.load %arg6[%c0_39, %c0_40, %c0_41] : memref<3x4x32xf32, #tpu.memory_space<vmem>>, vector<1x4x32xf32>
    %70 = vector.shape_cast %69 : vector<1x4x32xf32> to vector<4x32xf32>
    %cst_42 = arith.constant dense<0.000000e+00> : vector<32x32xf32>
    %71 = tpu.matmul %3, %70, %cst_42 {dimension_numbers = #tpu.dot_dimension_numbers<[1], [0], [0], [1], [0, 0, 1, 1], [], []>} : vector<32x4xf32>, vector<4x32xf32>, vector<32x32xf32> -> vector<32x32xf32>
    %72 = vector.broadcast %68 : vector<1x32xf32> to vector<32x32xf32>
    %73 = arith.addf %72, %71 : vector<32x32xf32>
    %c0_43 = arith.constant 0 : index
    %c0_44 = arith.constant 0 : index
    %c0_45 = arith.constant 0 : index
    %74 = vector.load %arg7[%c0_43, %c0_44, %c0_45] : memref<3x32x32xf32, #tpu.memory_space<vmem>>, vector<1x32x32xf32>
    %75 = vector.shape_cast %74 : vector<1x32x32xf32> to vector<32x32xf32>
    %cst_46 = arith.constant dense<0.000000e+00> : vector<32x32xf32>
    %76 = tpu.matmul %20, %75, %cst_46 {dimension_numbers = #tpu.dot_dimension_numbers<[1], [0], [0], [1], [0, 0, 1, 1], [], []>} : vector<32x32xf32>, vector<32x32xf32>, vector<32x32xf32> -> vector<32x32xf32>
    %77 = arith.addf %73, %76 : vector<32x32xf32>
    %c1_47 = arith.constant 1 : index
    %c0_48 = arith.constant 0 : index
    %c0_49 = arith.constant 0 : index
    %78 = vector.load %arg6[%c1_47, %c0_48, %c0_49] : memref<3x4x32xf32, #tpu.memory_space<vmem>>, vector<1x4x32xf32>
    %79 = vector.shape_cast %78 : vector<1x4x32xf32> to vector<4x32xf32>
    %cst_50 = arith.constant dense<0.000000e+00> : vector<32x32xf32>
    %80 = tpu.matmul %12, %79, %cst_50 {dimension_numbers = #tpu.dot_dimension_numbers<[1], [0], [0], [1], [0, 0, 1, 1], [], []>} : vector<32x4xf32>, vector<4x32xf32>, vector<32x32xf32> -> vector<32x32xf32>
    %81 = arith.addf %77, %80 : vector<32x32xf32>
    %c1_51 = arith.constant 1 : index
    %c0_52 = arith.constant 0 : index
    %c0_53 = arith.constant 0 : index
    %82 = vector.load %arg7[%c1_51, %c0_52, %c0_53] : memref<3x32x32xf32, #tpu.memory_space<vmem>>, vector<1x32x32xf32>
    %83 = vector.shape_cast %82 : vector<1x32x32xf32> to vector<32x32xf32>
    %cst_54 = arith.constant dense<0.000000e+00> : vector<32x32xf32>
    %84 = tpu.matmul %29, %83, %cst_54 {dimension_numbers = #tpu.dot_dimension_numbers<[1], [0], [0], [1], [0, 0, 1, 1], [], []>} : vector<32x32xf32>, vector<32x32xf32>, vector<32x32xf32> -> vector<32x32xf32>
    %85 = arith.addf %81, %84 : vector<32x32xf32>
    %c2_55 = arith.constant 2 : index
    %c0_56 = arith.constant 0 : index
    %c0_57 = arith.constant 0 : index
    %86 = vector.load %arg6[%c2_55, %c0_56, %c0_57] : memref<3x4x32xf32, #tpu.memory_space<vmem>>, vector<1x4x32xf32>
    %87 = vector.shape_cast %86 : vector<1x4x32xf32> to vector<4x32xf32>
    %cst_58 = arith.constant dense<0.000000e+00> : vector<32x32xf32>
    %88 = tpu.matmul %19, %87, %cst_58 {dimension_numbers = #tpu.dot_dimension_numbers<[1], [0], [0], [1], [0, 0, 1, 1], [], []>} : vector<32x4xf32>, vector<4x32xf32>, vector<32x32xf32> -> vector<32x32xf32>
    %89 = arith.addf %85, %88 : vector<32x32xf32>
    %c2_59 = arith.constant 2 : index
    %c0_60 = arith.constant 0 : index
    %c0_61 = arith.constant 0 : index
    %90 = vector.load %arg7[%c2_59, %c0_60, %c0_61] : memref<3x32x32xf32, #tpu.memory_space<vmem>>, vector<1x32x32xf32>
    %91 = vector.shape_cast %90 : vector<1x32x32xf32> to vector<32x32xf32>
    %cst_62 = arith.constant dense<0.000000e+00> : vector<32x32xf32>
    %92 = tpu.matmul %36, %91, %cst_62 {dimension_numbers = #tpu.dot_dimension_numbers<[1], [0], [0], [1], [0, 0, 1, 1], [], []>} : vector<32x32xf32>, vector<32x32xf32>, vector<32x32xf32> -> vector<32x32xf32>
    %93 = arith.addf %89, %92 : vector<32x32xf32>
    %94 = arith.negf %93 : vector<32x32xf32>
    %95 = math.exp %94 : vector<32x32xf32>
    %cst_63 = arith.constant 1.000000e+00 : f32
    %96 = vector.broadcast %cst_63 : f32 to vector<32x32xf32>
    %97 = arith.addf %96, %95 : vector<32x32xf32>
    %98 = arith.divf %96, %97 : vector<32x32xf32>
    %99 = vector.shape_cast %2 : vector<2x16x32xf32> to vector<32x32xf32>
    %100 = arith.mulf %67, %99 : vector<32x32xf32>
    %101 = vector.shape_cast %100 : vector<32x32xf32> to vector<2x16x32xf32>
    %102 = vector.shape_cast %101 : vector<2x16x32xf32> to vector<32x32xf32>
    %103 = vector.extract_strided_slice %101 {offsets = [0, 0, 0], sizes = [1, 16, 32], strides = [1, 1, 1]} : vector<2x16x32xf32> to vector<1x16x32xf32>
    %104 = vector.shape_cast %103 : vector<1x16x32xf32> to vector<16x32xf32>
    %105 = vector.extract_strided_slice %101 {offsets = [1, 0, 0], sizes = [1, 16, 32], strides = [1, 1, 1]} : vector<2x16x32xf32> to vector<1x16x32xf32>
    %106 = vector.shape_cast %105 : vector<1x16x32xf32> to vector<16x32xf32>
    %107 = tpu.concatenate %104, %106 in 1 : vector<16x32xf32>, vector<16x32xf32> -> vector<16x64xf32>
    %cst_64 = arith.constant dense<0.000000e+00> : vector<16x64xf32>
    %108 = tpu.matmul %0, %107, %cst_64 {dimension_numbers = #tpu.dot_dimension_numbers<[1], [0], [0], [1], [0, 0, 1, 1], [], []>} : vector<16x16xf32>, vector<16x64xf32>, vector<16x64xf32> -> vector<16x64xf32>
    %109 = vector.extract_strided_slice %108 {offsets = [0, 0], sizes = [16, 32], strides = [1, 1]} : vector<16x64xf32> to vector<16x32xf32>
    %110 = vector.extract_strided_slice %108 {offsets = [0, 32], sizes = [16, 32], strides = [1, 1]} : vector<16x64xf32> to vector<16x32xf32>
    %111 = tpu.concatenate %109, %110 in 0 : vector<16x32xf32>, vector<16x32xf32> -> vector<32x32xf32>
    %cst_65 = arith.constant dense<0.000000e+00> : vector<16x64xf32>
    %112 = tpu.matmul %0, %108, %cst_65 {dimension_numbers = #tpu.dot_dimension_numbers<[1], [0], [0], [1], [0, 0, 1, 1], [], []>} : vector<16x16xf32>, vector<16x64xf32>, vector<16x64xf32> -> vector<16x64xf32>
    %cst_66 = arith.constant 2.000000e+00 : f32
    %113 = vector.broadcast %cst_66 : f32 to vector<16x64xf32>
    %114 = arith.mulf %113, %112 : vector<16x64xf32>
    %115 = arith.subf %114, %107 : vector<16x64xf32>
    %116 = vector.extract_strided_slice %115 {offsets = [0, 0], sizes = [16, 32], strides = [1, 1]} : vector<16x64xf32> to vector<16x32xf32>
    %117 = vector.extract_strided_slice %115 {offsets = [0, 32], sizes = [16, 32], strides = [1, 1]} : vector<16x64xf32> to vector<16x32xf32>
    %118 = tpu.concatenate %116, %117 in 0 : vector<16x32xf32>, vector<16x32xf32> -> vector<32x32xf32>
    %c0_67 = arith.constant 0 : index
    %c0_68 = arith.constant 0 : index
    %119 = vector.load %arg12[%c0_67, %c0_68] : memref<1x32xf32, #tpu.memory_space<vmem>>, vector<1x32xf32>
    %c0_69 = arith.constant 0 : index
    %c0_70 = arith.constant 0 : index
    %c0_71 = arith.constant 0 : index
    %120 = vector.load %arg8[%c0_69, %c0_70, %c0_71] : memref<3x4x32xf32, #tpu.memory_space<vmem>>, vector<1x4x32xf32>
    %121 = vector.shape_cast %120 : vector<1x4x32xf32> to vector<4x32xf32>
    %cst_72 = arith.constant dense<0.000000e+00> : vector<32x32xf32>
    %122 = tpu.matmul %3, %121, %cst_72 {dimension_numbers = #tpu.dot_dimension_numbers<[1], [0], [0], [1], [0, 0, 1, 1], [], []>} : vector<32x4xf32>, vector<4x32xf32>, vector<32x32xf32> -> vector<32x32xf32>
    %123 = vector.broadcast %119 : vector<1x32xf32> to vector<32x32xf32>
    %124 = arith.addf %123, %122 : vector<32x32xf32>
    %c0_73 = arith.constant 0 : index
    %c0_74 = arith.constant 0 : index
    %c0_75 = arith.constant 0 : index
    %125 = vector.load %arg9[%c0_73, %c0_74, %c0_75] : memref<3x32x32xf32, #tpu.memory_space<vmem>>, vector<1x32x32xf32>
    %126 = vector.shape_cast %125 : vector<1x32x32xf32> to vector<32x32xf32>
    %cst_76 = arith.constant dense<0.000000e+00> : vector<32x32xf32>
    %127 = tpu.matmul %102, %126, %cst_76 {dimension_numbers = #tpu.dot_dimension_numbers<[1], [0], [0], [1], [0, 0, 1, 1], [], []>} : vector<32x32xf32>, vector<32x32xf32>, vector<32x32xf32> -> vector<32x32xf32>
    %128 = arith.addf %124, %127 : vector<32x32xf32>
    %c1_77 = arith.constant 1 : index
    %c0_78 = arith.constant 0 : index
    %c0_79 = arith.constant 0 : index
    %129 = vector.load %arg8[%c1_77, %c0_78, %c0_79] : memref<3x4x32xf32, #tpu.memory_space<vmem>>, vector<1x4x32xf32>
    %130 = vector.shape_cast %129 : vector<1x4x32xf32> to vector<4x32xf32>
    %cst_80 = arith.constant dense<0.000000e+00> : vector<32x32xf32>
    %131 = tpu.matmul %12, %130, %cst_80 {dimension_numbers = #tpu.dot_dimension_numbers<[1], [0], [0], [1], [0, 0, 1, 1], [], []>} : vector<32x4xf32>, vector<4x32xf32>, vector<32x32xf32> -> vector<32x32xf32>
    %132 = arith.addf %128, %131 : vector<32x32xf32>
    %c1_81 = arith.constant 1 : index
    %c0_82 = arith.constant 0 : index
    %c0_83 = arith.constant 0 : index
    %133 = vector.load %arg9[%c1_81, %c0_82, %c0_83] : memref<3x32x32xf32, #tpu.memory_space<vmem>>, vector<1x32x32xf32>
    %134 = vector.shape_cast %133 : vector<1x32x32xf32> to vector<32x32xf32>
    %cst_84 = arith.constant dense<0.000000e+00> : vector<32x32xf32>
    %135 = tpu.matmul %111, %134, %cst_84 {dimension_numbers = #tpu.dot_dimension_numbers<[1], [0], [0], [1], [0, 0, 1, 1], [], []>} : vector<32x32xf32>, vector<32x32xf32>, vector<32x32xf32> -> vector<32x32xf32>
    %136 = arith.addf %132, %135 : vector<32x32xf32>
    %c2_85 = arith.constant 2 : index
    %c0_86 = arith.constant 0 : index
    %c0_87 = arith.constant 0 : index
    %137 = vector.load %arg8[%c2_85, %c0_86, %c0_87] : memref<3x4x32xf32, #tpu.memory_space<vmem>>, vector<1x4x32xf32>
    %138 = vector.shape_cast %137 : vector<1x4x32xf32> to vector<4x32xf32>
    %cst_88 = arith.constant dense<0.000000e+00> : vector<32x32xf32>
    %139 = tpu.matmul %19, %138, %cst_88 {dimension_numbers = #tpu.dot_dimension_numbers<[1], [0], [0], [1], [0, 0, 1, 1], [], []>} : vector<32x4xf32>, vector<4x32xf32>, vector<32x32xf32> -> vector<32x32xf32>
    %140 = arith.addf %136, %139 : vector<32x32xf32>
    %c2_89 = arith.constant 2 : index
    %c0_90 = arith.constant 0 : index
    %c0_91 = arith.constant 0 : index
    %141 = vector.load %arg9[%c2_89, %c0_90, %c0_91] : memref<3x32x32xf32, #tpu.memory_space<vmem>>, vector<1x32x32xf32>
    %142 = vector.shape_cast %141 : vector<1x32x32xf32> to vector<32x32xf32>
    %cst_92 = arith.constant dense<0.000000e+00> : vector<32x32xf32>
    %143 = tpu.matmul %118, %142, %cst_92 {dimension_numbers = #tpu.dot_dimension_numbers<[1], [0], [0], [1], [0, 0, 1, 1], [], []>} : vector<32x32xf32>, vector<32x32xf32>, vector<32x32xf32> -> vector<32x32xf32>
    %144 = arith.addf %140, %143 : vector<32x32xf32>
    %145 = math.tanh %144 : vector<32x32xf32>
    %146 = arith.mulf %98, %99 : vector<32x32xf32>
    %cst_93 = arith.constant 1.000000e+00 : f32
    %147 = vector.broadcast %cst_93 : f32 to vector<32x32xf32>
    %148 = arith.subf %147, %98 : vector<32x32xf32>
    %149 = arith.mulf %148, %145 : vector<32x32xf32>
    %150 = arith.addf %146, %149 : vector<32x32xf32>
    %151 = vector.shape_cast %150 : vector<32x32xf32> to vector<2x16x32xf32>
    %c0_94 = arith.constant 0 : index
    %c0_95 = arith.constant 0 : index
    %c0_96 = arith.constant 0 : index
    %152 = vector.load %arg13[%c0_94, %c0_95, %c0_96] : memref<2x16x32xf32, #tpu.memory_space<vmem>>, vector<2x16x32xf32>
    tpu.vector_store %arg13[%c0_94, %c0_95, %c0_96], %151 {strides = array<i32>} : memref<2x16x32xf32, #tpu.memory_space<vmem>>, vector<2x16x32xf32>,
    return
  }
  func.func @transform_0(%arg0: i32) -> (i32, i32, i32) {
    %c0_i32 = arith.constant 0 : i32
    %c0_i32_0 = arith.constant 0 : i32
    %c0_i32_1 = arith.constant 0 : i32
    return %arg0, %c0_i32, %c0_i32_0 : i32, i32, i32
  }
  func.func @transform_1(%arg0: i32) -> (i32, i32, i32) {
    %c0_i32 = arith.constant 0 : i32
    %c0_i32_0 = arith.constant 0 : i32
    %c0_i32_1 = arith.constant 0 : i32
    return %arg0, %c0_i32, %c0_i32_0 : i32, i32, i32
  }
  func.func @transform_2(%arg0: i32) -> (i32, i32) {
    %c0_i32 = arith.constant 0 : i32
    %c0_i32_0 = arith.constant 0 : i32
    %c0_i32_1 = arith.constant 0 : i32
    return %c0_i32, %c0_i32_0 : i32, i32
  }
  func.func @transform_3(%arg0: i32) -> (i32, i32, i32) {
    %c0_i32 = arith.constant 0 : i32
    %c0_i32_0 = arith.constant 0 : i32
    %c0_i32_1 = arith.constant 0 : i32
    %c0_i32_2 = arith.constant 0 : i32
    return %c0_i32, %c0_i32_0, %c0_i32_1 : i32, i32, i32
  }
  func.func @transform_4(%arg0: i32) -> (i32, i32, i32) {
    %c0_i32 = arith.constant 0 : i32
    %c0_i32_0 = arith.constant 0 : i32
    %c0_i32_1 = arith.constant 0 : i32
    %c0_i32_2 = arith.constant 0 : i32
    return %c0_i32, %c0_i32_0, %c0_i32_1 : i32, i32, i32
  }
  func.func @transform_5(%arg0: i32) -> (i32, i32, i32) {
    %c0_i32 = arith.constant 0 : i32
    %c0_i32_0 = arith.constant 0 : i32
    %c0_i32_1 = arith.constant 0 : i32
    %c0_i32_2 = arith.constant 0 : i32
    return %c0_i32, %c0_i32_0, %c0_i32_1 : i32, i32, i32
  }
  func.func @transform_6(%arg0: i32) -> (i32, i32, i32) {
    %c0_i32 = arith.constant 0 : i32
    %c0_i32_0 = arith.constant 0 : i32
    %c0_i32_1 = arith.constant 0 : i32
    %c0_i32_2 = arith.constant 0 : i32
    return %c0_i32, %c0_i32_0, %c0_i32_1 : i32, i32, i32
  }
  func.func @transform_7(%arg0: i32) -> (i32, i32, i32) {
    %c0_i32 = arith.constant 0 : i32
    %c0_i32_0 = arith.constant 0 : i32
    %c0_i32_1 = arith.constant 0 : i32
    %c0_i32_2 = arith.constant 0 : i32
    return %c0_i32, %c0_i32_0, %c0_i32_1 : i32, i32, i32
  }
  func.func @transform_8(%arg0: i32) -> (i32, i32, i32) {
    %c0_i32 = arith.constant 0 : i32
    %c0_i32_0 = arith.constant 0 : i32
    %c0_i32_1 = arith.constant 0 : i32
    %c0_i32_2 = arith.constant 0 : i32
    return %c0_i32, %c0_i32_0, %c0_i32_1 : i32, i32, i32
  }
  func.func @transform_9(%arg0: i32) -> (i32, i32) {
    %c0_i32 = arith.constant 0 : i32
    %c0_i32_0 = arith.constant 0 : i32
    %c0_i32_1 = arith.constant 0 : i32
    return %c0_i32, %c0_i32_0 : i32, i32
  }
  func.func @transform_10(%arg0: i32) -> (i32, i32) {
    %c0_i32 = arith.constant 0 : i32
    %c0_i32_0 = arith.constant 0 : i32
    %c0_i32_1 = arith.constant 0 : i32
    return %c0_i32, %c0_i32_0 : i32, i32
  }
  func.func @transform_11(%arg0: i32) -> (i32, i32) {
    %c0_i32 = arith.constant 0 : i32
    %c0_i32_0 = arith.constant 0 : i32
    %c0_i32_1 = arith.constant 0 : i32
    return %c0_i32, %c0_i32_0 : i32, i32
  }
  func.func @transform_12(%arg0: i32) -> (i32, i32, i32) {
    %c0_i32 = arith.constant 0 : i32
    %c0_i32_0 = arith.constant 0 : i32
    %c0_i32_1 = arith.constant 0 : i32
    return %arg0, %c0_i32, %c0_i32_0 : i32, i32, i32
  }
}

</mosaic_0001>

<llo_original>
// kernel: dcgru_cell_forward.1
$region0: #{dcgru_cell_forward.1}
  #allocation0 [shape = 'u32[]', space=smem, size = 0x4, offset = 0x4, fixed_abs, tag = 'smem constant byte address 0x4 - core index']
  #allocation1 [shape = 'u32[144,128]{1,0:T(1,128)}', space=vmem, size = 0x12000, scoped, tag = 'internal scratch']
  %s0 = inlined_call_operand.vmem [shape: f32[2,16,4], index: 0, kind: input, shape index: {}]
  %s1 = inlined_call_operand.vmem [shape: f32[2,16,32], index: 1, kind: input, shape index: {}, may-alias: {1,12}]
  %s2 = inlined_call_operand.vmem [shape: f32[16,16], index: 2, kind: input, shape index: {}]
  %s3 = inlined_call_operand.vmem [shape: f32[3,4,32], index: 3, kind: input, shape index: {}]
  %s4 = inlined_call_operand.hbm [shape: f32[3,32,32], index: 4, kind: input, shape index: {}]
  %s5 = inlined_call_operand.vmem [shape: f32[3,4,32], index: 5, kind: input, shape index: {}]
  %s6 = inlined_call_operand.hbm [shape: f32[3,32,32], index: 6, kind: input, shape index: {}]
  %s7 = inlined_call_operand.vmem [shape: f32[3,4,32], index: 7, kind: input, shape index: {}]
  %s8 = inlined_call_operand.hbm [shape: f32[3,32,32], index: 8, kind: input, shape index: {}]
  %s9 = inlined_call_operand.vmem [shape: f32[1,32], index: 9, kind: input, shape index: {}]
  %s10 = inlined_call_operand.vmem [shape: f32[1,32], index: 10, kind: input, shape index: {}]
  %s11 = inlined_call_operand.vmem [shape: f32[1,32], index: 11, kind: input, shape index: {}]
  %s12 = inlined_call_operand.vmem [shape: f32[2,16,32], index: 12, kind: output, shape index: {}, may-alias: {1,12}]
  %s13 = sld [smem:[#allocation0]]
  $region70: #{dcgru_cell_forward.1} parent=0
    _
  %s15 = ssub.s32 1, %s13
  %s16 = scalar_select 0, %s15, %s13
  $region1: #{dcgru_cell_forward.1} parent=0
    #allocation2 [shape = 'u8[49152]{0}', space=vmem, size = 0xc000, scoped, tag = 'input window, operand 4, single buffered']
    #allocation3 [shape = 's32[1]{0}', space=sflag, size = 0x4, scoped, tag = 'scoped memory for dcgru_cell_forward.1']
    #allocation4 [shape = 'u8[49152]{0}', space=vmem, size = 0xc000, scoped, tag = 'input window, operand 6, single buffered']
    #allocation5 [shape = 's32[1]{0}', space=sflag, size = 0x4, scoped, tag = 'scoped memory for dcgru_cell_forward.1']
    #allocation6 [shape = 'u8[49152]{0}', space=vmem, size = 0xc000, scoped, tag = 'input window, operand 8, single buffered']
    %17 = vsyncpa [#allocation3], 0
    %18 = vsyncpa [#allocation5], 0
    // Predicated region
    $region2: #{dcgru_cell_forward.1} parent=1 // pred_check
      _
    $region3: #{dcgru_cell_forward.1} parent=1 // pred_check_branch
      %20 = sbr.rel (0) target = $region5
    $region4: #{dcgru_cell_forward.1} parent=1 // pred_region
      _
    $region5: #{dcgru_cell_forward.1} parent=1 // pred_fallthru
      _
    // Predicated region
    $region6: #{dcgru_cell_forward.1} parent=1 // pred_check
      _
    $region7: #{dcgru_cell_forward.1} parent=1 // pred_check_branch
      %22 = sbr.rel (0) target = $region9
    $region8: #{dcgru_cell_forward.1} parent=1 // pred_region
      _
    $region9: #{dcgru_cell_forward.1} parent=1 // pred_fallthru
      _
    // Predicated region
    $region10: #{dcgru_cell_forward.1} parent=1 // pred_check
      _
    $region11: #{dcgru_cell_forward.1} parent=1 // pred_check_branch
      %24 = sbr.rel (0) target = $region13
    $region12: #{dcgru_cell_forward.1} parent=1 // pred_region
      _
    $region13: #{dcgru_cell_forward.1} parent=1 // pred_fallthru
      _
    // Predicated region
    $region14: #{dcgru_cell_forward.1} parent=1 // pred_check
      _
    $region15: #{dcgru_cell_forward.1} parent=1 // pred_check_branch
      %26 = sbr.rel (0) target = $region17
    $region16: #{dcgru_cell_forward.1} parent=1 // pred_region
      _
    $region17: #{dcgru_cell_forward.1} parent=1 // pred_fallthru
      _
    // Predicated region
    $region18: #{dcgru_cell_forward.1} parent=1 // pred_check
      _
    $region19: #{dcgru_cell_forward.1} parent=1 // pred_check_branch
      %28 = sbr.rel (0) target = $region21
    $region20: #{dcgru_cell_forward.1} parent=1 // pred_region
      %s30 = ssub.s32 1536, 1536
      %31 = vsyncadd [#allocation3], %s30
      %s32 = sshll.u32 [#allocation2], 4
      %s33 = int_to_ptr.vmem [resolvable:$true] %s32
      %38 = dma.hbm_to_vmem [thread:$0]  %s4, 1536, %s33, [#allocation3], 128, 128, 8
    $region21: #{dcgru_cell_forward.1} parent=1 // pred_fallthru
      _
    // Predicated region
    $region22: #{dcgru_cell_forward.1} parent=1 // pred_check
      _
    $region23: #{dcgru_cell_forward.1} parent=1 // pred_check_branch
      %40 = sbr.rel (0) target = $region25
    $region24: #{dcgru_cell_forward.1} parent=1 // pred_region
      _
    $region25: #{dcgru_cell_forward.1} parent=1 // pred_fallthru
      _
    // Predicated region
    $region26: #{dcgru_cell_forward.1} parent=1 // pred_check
      _
    $region27: #{dcgru_cell_forward.1} parent=1 // pred_check_branch
      %42 = sbr.rel (0) target = $region29
    $region28: #{dcgru_cell_forward.1} parent=1 // pred_region
      %s44 = ssub.s32 1536, 1536
      %45 = vsyncadd [#allocation5], %s44
      %s46 = sshll.u32 [#allocation4], 4
      %s47 = int_to_ptr.vmem [resolvable:$true] %s46
      %52 = dma.hbm_to_vmem [thread:$0]  %s6, 1536, %s47, [#allocation5], 128, 128, 8
    $region29: #{dcgru_cell_forward.1} parent=1 // pred_fallthru
      _
    // Predicated region
    $region30: #{dcgru_cell_forward.1} parent=1 // pred_check
      _
    $region31: #{dcgru_cell_forward.1} parent=1 // pred_check_branch
      %54 = sbr.rel (0) target = $region33
    $region32: #{dcgru_cell_forward.1} parent=1 // pred_region
      _
    $region33: #{dcgru_cell_forward.1} parent=1 // pred_fallthru
      _
    // Predicated region
    $region34: #{dcgru_cell_forward.1} parent=1 // pred_check
      _
    $region35: #{dcgru_cell_forward.1} parent=1 // pred_check_branch
      %56 = sbr.rel (0) target = $region37
    $region36: #{dcgru_cell_forward.1} parent=1 // pred_region
      %s58 = ssub.s32 1536, 1536
      %59 = vsyncadd [#allocation5], %s58
      %s60 = sshll.u32 [#allocation6], 4
      %s61 = int_to_ptr.vmem [resolvable:$true] %s60
      %66 = dma.hbm_to_vmem [thread:$0]  %s8, 1536, %s61, [#allocation5], 128, 128, 8
    $region37: #{dcgru_cell_forward.1} parent=1 // pred_fallthru
      _
    // Predicated region
    $region38: #{dcgru_cell_forward.1} parent=1 // pred_check
      _
    $region39: #{dcgru_cell_forward.1} parent=1 // pred_check_branch
      %68 = sbr.rel (0) target = $region41
    $region40: #{dcgru_cell_forward.1} parent=1 // pred_region
      _
    $region41: #{dcgru_cell_forward.1} parent=1 // pred_fallthru
      _
    // Predicated region
    $region42: #{dcgru_cell_forward.1} parent=1 // pred_check
      _
    $region43: #{dcgru_cell_forward.1} parent=1 // pred_check_branch
      %70 = sbr.rel (0) target = $region45
    $region44: #{dcgru_cell_forward.1} parent=1 // pred_region
      _
    $region45: #{dcgru_cell_forward.1} parent=1 // pred_fallthru
      _
    // Predicated region
    $region46: #{dcgru_cell_forward.1} parent=1 // pred_check
      _
    $region47: #{dcgru_cell_forward.1} parent=1 // pred_check_branch
      %72 = sbr.rel (0) target = $region49
    $region48: #{dcgru_cell_forward.1} parent=1 // pred_region
      _
    $region49: #{dcgru_cell_forward.1} parent=1 // pred_fallthru
      _
    // Predicated region
    $region50: #{dcgru_cell_forward.1} parent=1 // pred_check
      _
    $region51: #{dcgru_cell_forward.1} parent=1 // pred_check_branch
      %74 = sbr.rel (0) target = $region53
    $region52: #{dcgru_cell_forward.1} parent=1 // pred_region
      %75 = dma.done [#allocation3], 1536
    $region53: #{dcgru_cell_forward.1} parent=1 // pred_fallthru
      _
    // Predicated region
    $region54: #{dcgru_cell_forward.1} parent=1 // pred_check
      _
    $region55: #{dcgru_cell_forward.1} parent=1 // pred_check_branch
      %77 = sbr.rel (0) target = $region57
    $region56: #{dcgru_cell_forward.1} parent=1 // pred_region
      %78 = dma.done [#allocation5], 1536
    $region57: #{dcgru_cell_forward.1} parent=1 // pred_fallthru
      _
    // Predicated region
    $region58: #{dcgru_cell_forward.1} parent=1 // pred_check
      _
    $region59: #{dcgru_cell_forward.1} parent=1 // pred_check_branch
      %80 = sbr.rel (0) target = $region61
    $region60: #{dcgru_cell_forward.1} parent=1 // pred_region
      %81 = dma.done [#allocation5], 1536
    $region61: #{dcgru_cell_forward.1} parent=1 // pred_fallthru
      _
    %v82 = vld [vmem:[%s2] sm:$0xff]
    %v83 = vld [vmem:[%s2 + $0x8] sm:$0xff]
    %v84 = vld [vmem:[%s0] sm:$0xff]
    %v85 = vld [vmem:[%s0 + $0x8] sm:$0xff]
    %v86 = vld [vmem:[%s0 + $0x10] sm:$0xff]
    %v87 = vld [vmem:[%s0 + $0x18] sm:$0xff]
    %v88 = vld [vmem:[%s1] sm:$0xff]
    %v89 = vld [vmem:[%s1 + $0x8] sm:$0xff]
    %v90 = vld [vmem:[%s1 + $0x10] sm:$0xff]
    %v91 = vld [vmem:[%s1 + $0x18] sm:$0xff]
    %94 = vrot.lane.b32.xlu0 %v86, 4
    %v95 = vpop.permute.xlu0 %94
    %96 = vrot.lane.b32.xlu0 %v87, 4
    %v97 = vpop.permute.xlu0 %96
    %vm100 = vcmask 31744
    %v101 = vsel %vm100, %v84, %v95
    %v102 = vsel %vm100, %v85, %v97
    %vm103 = vcmask 130048
    %v105 = vsel %vm103, %v82, 0
    %v108 = vsel %vm103, %v83, 0
    %110 = vmatprep.subr.mxu0 0.0
    %111 = vmatpush1.msra.mxu0 %v101
    %112 = vmatprep.subr.mxu0 0.0
    %113 = vmatpush1.msra.mxu0 %v102
    %114 = vmatprep.subr.mxu0 0.0
    %115 = vmatpush1.msra.mxu0 0.0
    %116 = vmatprep.subr.mxu0 0.0
    %117 = vmatpush1.msra.mxu0 0.0
    %118 = vmatprep.subr.mxu0 0.0
    %119 = vmatpush1.msra.mxu0 0.0
    %120 = vmatprep.subr.mxu0 0.0
    %121 = vmatpush1.msra.mxu0 0.0
    %122 = vmatprep.subr.mxu0 0.0
    %123 = vmatpush1.msra.mxu0 0.0
    %124 = vmatprep.subr.mxu0 0.0
    %125 = vmatpush1.msra.mxu0 0.0
    %126 = vmatprep.subr.mxu0 0.0
    %127 = vmatpush1.msra.mxu0 0.0
    %128 = vmatprep.subr.mxu0 0.0
    %129 = vmatpush1.msra.mxu0 0.0
    %130 = vmatprep.subr.mxu0 0.0
    %131 = vmatpush1.msra.mxu0 0.0
    %132 = vmatprep.subr.mxu0 0.0
    %133 = vmatpush1.msra.mxu0 0.0
    %134 = vmatprep.subr.mxu0 0.0
    %135 = vmatpush1.msra.mxu0 0.0
    %136 = vmatprep.subr.mxu0 0.0
    %137 = vmatpush1.msra.mxu0 0.0
    %138 = vmatprep.subr.mxu0 0.0
    %139 = vmatpush1.msra.mxu0 0.0
    %140 = vmatprep.subr.mxu0 0.0
    %141 = vmatpush1.msra.mxu0 0.0
    %142 = vmatprep.subr.mxu0 0.0
    %143 = vmatpush1.msra.mxu0 0.0
    %144 = vmatprep.subr.mxu0 0.0
    %145 = vmatpush1.msra.mxu0 0.0
    %146 = vmatprep.subr.mxu0 0.0
    %147 = vmatpush1.msra.mxu0 0.0
    %148 = vmatprep.subr.mxu0 0.0
    %149 = vmatpush1.msra.mxu0 0.0
    %150 = vmatprep.subr.mxu0 0.0
    %151 = vmatpush1.msra.mxu0 0.0
    %152 = vmatprep.subr.mxu0 0.0
    %153 = vmatpush1.msra.mxu0 0.0
    %154 = vmatprep.subr.mxu0 0.0
    %155 = vmatpush1.msra.mxu0 0.0
    %156 = vmatprep.subr.mxu0 0.0
    %157 = vmatpush1.msra.mxu0 0.0
    %158 = vmatprep.subr.mxu0 0.0
    %159 = vmatpush1.msra.mxu0 0.0
    %160 = vmatprep.subr.mxu0 0.0
    %161 = vmatpush1.msra.mxu0 0.0
    %162 = vmatprep.subr.mxu0 0.0
    %163 = vmatpush1.msra.mxu0 0.0
    %164 = vmatprep.subr.mxu0 0.0
    %165 = vmatpush1.msra.mxu0 0.0
    %166 = vmatprep.subr.mxu0 0.0
    %167 = vmatpush1.msra.mxu0 0.0
    %168 = vmatprep.subr.mxu0 0.0
    %169 = vmatpush1.msra.mxu0 0.0
    %170 = vmatprep.subr.mxu0 0.0
    %171 = vmatpush1.msra.mxu0 0.0
    %172 = vmatprep.subr.mxu0 0.0
    %173 = vmatpush1.msra.mxu0 0.0
    %174 = vmatprep.mubr.f32.mxu0 0.0
    %175 = vmatmul.mubr.f32.gmra.mrb[0].mxu0 %v105
    %v176 = vpop.f32.mrb[0].mxu0
    %v177 = vadd.f32 0.0, %v176
    %v178 = vpop.f32.mrb[0].mxu0
    %179 = vmatprep.mubr.f32.mxu0 0.0
    %180 = vmatmul.mubr.f32.gmra.mrb[0].mxu0 %v108
    %v181 = vpop.f32.mrb[0].mxu0
    %v182 = vadd.f32 0.0, %v181
    %v183 = vpop.f32.mrb[0].mxu0
    %184 = vdwg.mxu0
    %187 = vrot.lane.b32.xlu0 %v177, 124
    %v188 = vpop.permute.xlu0 %187
    %189 = vrot.lane.b32.xlu0 %v182, 124
    %v190 = vpop.permute.xlu0 %189
    %191 = vmatprep.subr.mxu0 0.0
    %192 = vmatpush1.msra.mxu0 %v177
    %193 = vmatprep.subr.mxu0 0.0
    %194 = vmatpush1.msra.mxu0 %v182
    %195 = vmatprep.subr.mxu0 0.0
    %196 = vmatpush1.msra.mxu0 0.0
    %197 = vmatprep.subr.mxu0 0.0
    %198 = vmatpush1.msra.mxu0 0.0
    %199 = vmatprep.subr.mxu0 0.0
    %200 = vmatpush1.msra.mxu0 0.0
    %201 = vmatprep.subr.mxu0 0.0
    %202 = vmatpush1.msra.mxu0 0.0
    %203 = vmatprep.subr.mxu0 0.0
    %204 = vmatpush1.msra.mxu0 0.0
    %205 = vmatprep.subr.mxu0 0.0
    %206 = vmatpush1.msra.mxu0 0.0
    %207 = vmatprep.subr.mxu0 0.0
    %208 = vmatpush1.msra.mxu0 0.0
    %209 = vmatprep.subr.mxu0 0.0
    %210 = vmatpush1.msra.mxu0 0.0
    %211 = vmatprep.subr.mxu0 0.0
    %212 = vmatpush1.msra.mxu0 0.0
    %213 = vmatprep.subr.mxu0 0.0
    %214 = vmatpush1.msra.mxu0 0.0
    %215 = vmatprep.subr.mxu0 0.0
    %216 = vmatpush1.msra.mxu0 0.0
    %217 = vmatprep.subr.mxu0 0.0
    %218 = vmatpush1.msra.mxu0 0.0
    %219 = vmatprep.subr.mxu0 0.0
    %220 = vmatpush1.msra.mxu0 0.0
    %221 = vmatprep.subr.mxu0 0.0
    %222 = vmatpush1.msra.mxu0 0.0
    %223 = vmatprep.subr.mxu0 0.0
    %224 = vmatpush1.msra.mxu0 0.0
    %225 = vmatprep.subr.mxu0 0.0
    %226 = vmatpush1.msra.mxu0 0.0
    %227 = vmatprep.subr.mxu0 0.0
    %228 = vmatpush1.msra.mxu0 0.0
    %229 = vmatprep.subr.mxu0 0.0
    %230 = vmatpush1.msra.mxu0 0.0
    %231 = vmatprep.subr.mxu0 0.0
    %232 = vmatpush1.msra.mxu0 0.0
    %233 = vmatprep.subr.mxu0 0.0
    %234 = vmatpush1.msra.mxu0 0.0
    %235 = vmatprep.subr.mxu0 0.0
    %236 = vmatpush1.msra.mxu0 0.0
    %237 = vmatprep.subr.mxu0 0.0
    %238 = vmatpush1.msra.mxu0 0.0
    %239 = vmatprep.subr.mxu0 0.0
    %240 = vmatpush1.msra.mxu0 0.0
    %241 = vmatprep.subr.mxu0 0.0
    %242 = vmatpush1.msra.mxu0 0.0
    %243 = vmatprep.subr.mxu0 0.0
    %244 = vmatpush1.msra.mxu0 0.0
    %245 = vmatprep.subr.mxu0 0.0
    %246 = vmatpush1.msra.mxu0 0.0
    %247 = vmatprep.subr.mxu0 0.0
    %248 = vmatpush1.msra.mxu0 0.0
    %249 = vmatprep.subr.mxu0 0.0
    %250 = vmatpush1.msra.mxu0 0.0
    %251 = vmatprep.subr.mxu0 0.0
    %252 = vmatpush1.msra.mxu0 0.0
    %253 = vmatprep.subr.mxu0 0.0
    %254 = vmatpush1.msra.mxu0 0.0
    %255 = vmatprep.mubr.f32.mxu0 0.0
    %256 = vmatmul.mubr.f32.gmra.mrb[0].mxu0 %v105
    %v257 = vpop.f32.mrb[0].mxu0
    %v258 = vadd.f32 0.0, %v257
    %v259 = vpop.f32.mrb[0].mxu0
    %260 = vmatprep.mubr.f32.mxu0 0.0
    %261 = vmatmul.mubr.f32.gmra.mrb[0].mxu0 %v108
    %v262 = vpop.f32.mrb[0].mxu0
    %v263 = vadd.f32 0.0, %v262
    %v264 = vpop.f32.mrb[0].mxu0
    %265 = vdwg.mxu0
    %v266 = vmul.f32 %v258, 2.0
    %v267 = vmul.f32 %v263, 2.0
    %v268 = vsub.f32 %v266, %v101
    %v269 = vsub.f32 %v267, %v102
    %272 = vrot.lane.b32.xlu0 %v268, 124
    %v273 = vpop.permute.xlu0 %272
    %274 = vrot.lane.b32.xlu0 %v269, 124
    %v275 = vpop.permute.xlu0 %274
    %278 = vrot.lane.b32.xlu0 %v90, 32
    %v279 = vpop.permute.xlu0 %278
    %280 = vrot.lane.b32.xlu0 %v91, 32
    %v281 = vpop.permute.xlu0 %280
    %vm284 = vcmask 261120
    %v285 = vsel %vm284, %v88, %v279
    %v286 = vsel %vm284, %v89, %v281
    %287 = vmatprep.subr.mxu0 0.0
    %288 = vmatpush1.msra.mxu0 %v285
    %289 = vmatprep.subr.mxu0 0.0
    %290 = vmatpush1.msra.mxu0 %v286
    %291 = vmatprep.subr.mxu0 0.0
    %292 = vmatpush1.msra.mxu0 0.0
    %293 = vmatprep.subr.mxu0 0.0
    %294 = vmatpush1.msra.mxu0 0.0
    %295 = vmatprep.subr.mxu0 0.0
    %296 = vmatpush1.msra.mxu0 0.0
    %297 = vmatprep.subr.mxu0 0.0
    %298 = vmatpush1.msra.mxu0 0.0
    %299 = vmatprep.subr.mxu0 0.0
    %300 = vmatpush1.msra.mxu0 0.0
    %301 = vmatprep.subr.mxu0 0.0
    %302 = vmatpush1.msra.mxu0 0.0
    %303 = vmatprep.subr.mxu0 0.0
    %304 = vmatpush1.msra.mxu0 0.0
    %305 = vmatprep.subr.mxu0 0.0
    %306 = vmatpush1.msra.mxu0 0.0
    %307 = vmatprep.subr.mxu0 0.0
    %308 = vmatpush1.msra.mxu0 0.0
    %309 = vmatprep.subr.mxu0 0.0
    %310 = vmatpush1.msra.mxu0 0.0
    %311 = vmatprep.subr.mxu0 0.0
    %312 = vmatpush1.msra.mxu0 0.0
    %313 = vmatprep.subr.mxu0 0.0
    %314 = vmatpush1.msra.mxu0 0.0
    %315 = vmatprep.subr.mxu0 0.0
    %316 = vmatpush1.msra.mxu0 0.0
    %317 = vmatprep.subr.mxu0 0.0
    %318 = vmatpush1.msra.mxu0 0.0
    %319 = vmatprep.subr.mxu0 0.0
    %320 = vmatpush1.msra.mxu0 0.0
    %321 = vmatprep.subr.mxu0 0.0
    %322 = vmatpush1.msra.mxu0 0.0
    %323 = vmatprep.subr.mxu0 0.0
    %324 = vmatpush1.msra.mxu0 0.0
    %325 = vmatprep.subr.mxu0 0.0
    %326 = vmatpush1.msra.mxu0 0.0
    %327 = vmatprep.subr.mxu0 0.0
    %328 = vmatpush1.msra.mxu0 0.0
    %329 = vmatprep.subr.mxu0 0.0
    %330 = vmatpush1.msra.mxu0 0.0
    %331 = vmatprep.subr.mxu0 0.0
    %332 = vmatpush1.msra.mxu0 0.0
    %333 = vmatprep.subr.mxu0 0.0
    %334 = vmatpush1.msra.mxu0 0.0
    %335 = vmatprep.subr.mxu0 0.0
    %336 = vmatpush1.msra.mxu0 0.0
    %337 = vmatprep.subr.mxu0 0.0
    %338 = vmatpush1.msra.mxu0 0.0
    %339 = vmatprep.subr.mxu0 0.0
    %340 = vmatpush1.msra.mxu0 0.0
    %341 = vmatprep.subr.mxu0 0.0
    %342 = vmatpush1.msra.mxu0 0.0
    %343 = vmatprep.subr.mxu0 0.0
    %344 = vmatpush1.msra.mxu0 0.0
    %345 = vmatprep.subr.mxu0 0.0
    %346 = vmatpush1.msra.mxu0 0.0
    %347 = vmatprep.subr.mxu0 0.0
    %348 = vmatpush1.msra.mxu0 0.0
    %349 = vmatprep.subr.mxu0 0.0
    %350 = vmatpush1.msra.mxu0 0.0
    %351 = vmatprep.mubr.f32.mxu0 0.0
    %352 = vmatmul.mubr.f32.gmra.mrb[0].mxu0 %v105
    %v353 = vpop.f32.mrb[0].mxu0
    %v354 = vadd.f32 0.0, %v353
    %v355 = vpop.f32.mrb[0].mxu0
    %356 = vmatprep.mubr.f32.mxu0 0.0
    %357 = vmatmul.mubr.f32.gmra.mrb[0].mxu0 %v108
    %v358 = vpop.f32.mrb[0].mxu0
    %v359 = vadd.f32 0.0, %v358
    %v360 = vpop.f32.mrb[0].mxu0
    %361 = vdwg.mxu0
    %364 = vrot.lane.b32.xlu0 %v354, 96
    %v365 = vpop.permute.xlu0 %364
    %366 = vrot.lane.b32.xlu0 %v359, 96
    %v367 = vpop.permute.xlu0 %366
    %368 = vmatprep.subr.mxu0 0.0
    %369 = vmatpush1.msra.mxu0 %v354
    %370 = vmatprep.subr.mxu0 0.0
    %371 = vmatpush1.msra.mxu0 %v359
    %372 = vmatprep.subr.mxu0 0.0
    %373 = vmatpush1.msra.mxu0 0.0
    %374 = vmatprep.subr.mxu0 0.0
    %375 = vmatpush1.msra.mxu0 0.0
    %376 = vmatprep.subr.mxu0 0.0
    %377 = vmatpush1.msra.mxu0 0.0
    %378 = vmatprep.subr.mxu0 0.0
    %379 = vmatpush1.msra.mxu0 0.0
    %380 = vmatprep.subr.mxu0 0.0
    %381 = vmatpush1.msra.mxu0 0.0
    %382 = vmatprep.subr.mxu0 0.0
    %383 = vmatpush1.msra.mxu0 0.0
    %384 = vmatprep.subr.mxu0 0.0
    %385 = vmatpush1.msra.mxu0 0.0
    %386 = vmatprep.subr.mxu0 0.0
    %387 = vmatpush1.msra.mxu0 0.0
    %388 = vmatprep.subr.mxu0 0.0
    %389 = vmatpush1.msra.mxu0 0.0
    %390 = vmatprep.subr.mxu0 0.0
    %391 = vmatpush1.msra.mxu0 0.0
    %392 = vmatprep.subr.mxu0 0.0
    %393 = vmatpush1.msra.mxu0 0.0
    %394 = vmatprep.subr.mxu0 0.0
    %395 = vmatpush1.msra.mxu0 0.0
    %396 = vmatprep.subr.mxu0 0.0
    %397 = vmatpush1.msra.mxu0 0.0
    %398 = vmatprep.subr.mxu0 0.0
    %399 = vmatpush1.msra.mxu0 0.0
    %400 = vmatprep.subr.mxu0 0.0
    %401 = vmatpush1.msra.mxu0 0.0
    %402 = vmatprep.subr.mxu0 0.0
    %403 = vmatpush1.msra.mxu0 0.0
    %404 = vmatprep.subr.mxu0 0.0
    %405 = vmatpush1.msra.mxu0 0.0
    %406 = vmatprep.subr.mxu0 0.0
    %407 = vmatpush1.msra.mxu0 0.0
    %408 = vmatprep.subr.mxu0 0.0
    %409 = vmatpush1.msra.mxu0 0.0
    %410 = vmatprep.subr.mxu0 0.0
    %411 = vmatpush1.msra.mxu0 0.0
    %412 = vmatprep.subr.mxu0 0.0
    %413 = vmatpush1.msra.mxu0 0.0
    %414 = vmatprep.subr.mxu0 0.0
    %415 = vmatpush1.msra.mxu0 0.0
    %416 = vmatprep.subr.mxu0 0.0
    %417 = vmatpush1.msra.mxu0 0.0
    %418 = vmatprep.subr.mxu0 0.0
    %419 = vmatpush1.msra.mxu0 0.0
    %420 = vmatprep.subr.mxu0 0.0
    %421 = vmatpush1.msra.mxu0 0.0
    %422 = vmatprep.subr.mxu0 0.0
    %423 = vmatpush1.msra.mxu0 0.0
    %424 = vmatprep.subr.mxu0 0.0
    %425 = vmatpush1.msra.mxu0 0.0
    %426 = vmatprep.subr.mxu0 0.0
    %427 = vmatpush1.msra.mxu0 0.0
    %428 = vmatprep.subr.mxu0 0.0
    %429 = vmatpush1.msra.mxu0 0.0
    %430 = vmatprep.subr.mxu0 0.0
    %431 = vmatpush1.msra.mxu0 0.0
    %432 = vmatprep.mubr.f32.mxu0 0.0
    %433 = vmatmul.mubr.f32.gmra.mrb[0].mxu0 %v105
    %v434 = vpop.f32.mrb[0].mxu0
    %v435 = vadd.f32 0.0, %v434
    %v436 = vpop.f32.mrb[0].mxu0
    %437 = vmatprep.mubr.f32.mxu0 0.0
    %438 = vmatmul.mubr.f32.gmra.mrb[0].mxu0 %v108
    %v439 = vpop.f32.mrb[0].mxu0
    %v440 = vadd.f32 0.0, %v439
    %v441 = vpop.f32.mrb[0].mxu0
    %442 = vdwg.mxu0
    %v443 = vmul.f32 %v435, 2.0
    %v444 = vmul.f32 %v440, 2.0
    %v445 = vsub.f32 %v443, %v285
    %v446 = vsub.f32 %v444, %v286
    %449 = vrot.lane.b32.xlu0 %v445, 96
    %v450 = vpop.permute.xlu0 %449
    %451 = vrot.lane.b32.xlu0 %v446, 96
    %v452 = vpop.permute.xlu0 %451
    %v453 = vld [vmem:[%s9] sm:$0x1]
    %v454 = vld [vmem:[%s3] sm:$0xf]
    %v456 = vsel %vm100, %v84, 0
    %v459 = vsel %vm100, %v85, 0
    %v461 = vsel %vm100, %v86, 0
    %v463 = vsel %vm100, %v87, 0
    %vm465 = vcmask 1043456
    %v467 = vsel %vm465, %v454, 0
    %469 = vmatprep.subr.mxu0 0.0
    %470 = vmatpush1.msra.mxu0 %v467
    %471 = vmatprep.subr.mxu0 0.0
    %472 = vmatpush1.msra.mxu0 0.0
    %473 = vmatprep.subr.mxu0 0.0
    %474 = vmatpush1.msra.mxu0 0.0
    %475 = vmatprep.subr.mxu0 0.0
    %476 = vmatpush1.msra.mxu0 0.0
    %477 = vmatprep.subr.mxu0 0.0
    %478 = vmatpush1.msra.mxu0 0.0
    %479 = vmatprep.subr.mxu0 0.0
    %480 = vmatpush1.msra.mxu0 0.0
    %481 = vmatprep.subr.mxu0 0.0
    %482 = vmatpush1.msra.mxu0 0.0
    %483 = vmatprep.subr.mxu0 0.0
    %484 = vmatpush1.msra.mxu0 0.0
    %485 = vmatprep.subr.mxu0 0.0
    %486 = vmatpush1.msra.mxu0 0.0
    %487 = vmatprep.subr.mxu0 0.0
    %488 = vmatpush1.msra.mxu0 0.0
    %489 = vmatprep.subr.mxu0 0.0
    %490 = vmatpush1.msra.mxu0 0.0
    %491 = vmatprep.subr.mxu0 0.0
    %492 = vmatpush1.msra.mxu0 0.0
    %493 = vmatprep.subr.mxu0 0.0
    %494 = vmatpush1.msra.mxu0 0.0
    %495 = vmatprep.subr.mxu0 0.0
    %496 = vmatpush1.msra.mxu0 0.0
    %497 = vmatprep.subr.mxu0 0.0
    %498 = vmatpush1.msra.mxu0 0.0
    %499 = vmatprep.subr.mxu0 0.0
    %500 = vmatpush1.msra.mxu0 0.0
    %501 = vmatprep.subr.mxu0 0.0
    %502 = vmatpush1.msra.mxu0 0.0
    %503 = vmatprep.subr.mxu0 0.0
    %504 = vmatpush1.msra.mxu0 0.0
    %505 = vmatprep.subr.mxu0 0.0
    %506 = vmatpush1.msra.mxu0 0.0
    %507 = vmatprep.subr.mxu0 0.0
    %508 = vmatpush1.msra.mxu0 0.0
    %509 = vmatprep.subr.mxu0 0.0
    %510 = vmatpush1.msra.mxu0 0.0
    %511 = vmatprep.subr.mxu0 0.0
    %512 = vmatpush1.msra.mxu0 0.0
    %513 = vmatprep.subr.mxu0 0.0
    %514 = vmatpush1.msra.mxu0 0.0
    %515 = vmatprep.subr.mxu0 0.0
    %516 = vmatpush1.msra.mxu0 0.0
    %517 = vmatprep.subr.mxu0 0.0
    %518 = vmatpush1.msra.mxu0 0.0
    %519 = vmatprep.subr.mxu0 0.0
    %520 = vmatpush1.msra.mxu0 0.0
    %521 = vmatprep.subr.mxu0 0.0
    %522 = vmatpush1.msra.mxu0 0.0
    %523 = vmatprep.subr.mxu0 0.0
    %524 = vmatpush1.msra.mxu0 0.0
    %525 = vmatprep.subr.mxu0 0.0
    %526 = vmatpush1.msra.mxu0 0.0
    %527 = vmatprep.subr.mxu0 0.0
    %528 = vmatpush1.msra.mxu0 0.0
    %529 = vmatprep.subr.mxu0 0.0
    %530 = vmatpush1.msra.mxu0 0.0
    %531 = vmatprep.subr.mxu0 0.0
    %532 = vmatpush1.msra.mxu0 0.0
    %533 = vmatprep.mubr.f32.mxu0 0.0
    %534 = vmatmul.mubr.f32.gmra.mrb[0].mxu0 %v456
    %v535 = vpop.f32.mrb[0].mxu0
    %v536 = vadd.f32 0.0, %v535
    %v537 = vpop.f32.mrb[0].mxu0
    %538 = vmatprep.mubr.f32.mxu0 0.0
    %539 = vmatmul.mubr.f32.gmra.mrb[0].mxu0 %v459
    %v540 = vpop.f32.mrb[0].mxu0
    %v541 = vadd.f32 0.0, %v540
    %v542 = vpop.f32.mrb[0].mxu0
    %543 = vmatprep.mubr.f32.mxu0 0.0
    %544 = vmatmul.mubr.f32.gmra.mrb[0].mxu0 %v461
    %v545 = vpop.f32.mrb[0].mxu0
    %v546 = vadd.f32 0.0, %v545
    %v547 = vpop.f32.mrb[0].mxu0
    %548 = vmatprep.mubr.f32.mxu0 0.0
    %549 = vmatmul.mubr.f32.gmra.mrb[0].mxu0 %v463
    %v550 = vpop.f32.mrb[0].mxu0
    %v551 = vadd.f32 0.0, %v550
    %v552 = vpop.f32.mrb[0].mxu0
    %553 = vdwg.mxu0
    %v555 = vlaneseq
    %v556 = vshrl.u32 %v555, 7
    %v557 = vsub.s32 0, %v556
    %v558 = vrot.slane %v453, %v557
    %v560 = vadd.f32 %v558, %v536
    %v561 = vadd.f32 %v558, %v541
    %v562 = vadd.f32 %v558, %v546
    %v563 = vadd.f32 %v558, %v551
    %v564 = vld [vmem:[#allocation2] sm:$0xff]
    %v565 = vld [vmem:[#allocation2 + $0x8] sm:$0xff]
    %v566 = vld [vmem:[#allocation2 + $0x10] sm:$0xff]
    %v567 = vld [vmem:[#allocation2 + $0x18] sm:$0xff]
    %v569 = vsel %vm284, %v88, 0
    %v572 = vsel %vm284, %v89, 0
    %v574 = vsel %vm284, %v90, 0
    %v576 = vsel %vm284, %v91, 0
    %578 = vmatprep.subr.mxu0 0.0
    %579 = vmatpush1.msra.mxu0 %v564
    %580 = vmatprep.subr.mxu0 0.0
    %581 = vmatpush1.msra.mxu0 %v565
    %582 = vmatprep.subr.mxu0 0.0
    %583 = vmatpush1.msra.mxu0 %v566
    %584 = vmatprep.subr.mxu0 0.0
    %585 = vmatpush1.msra.mxu0 %v567
    %586 = vmatprep.subr.mxu0 0.0
    %587 = vmatpush1.msra.mxu0 0.0
    %588 = vmatprep.subr.mxu0 0.0
    %589 = vmatpush1.msra.mxu0 0.0
    %590 = vmatprep.subr.mxu0 0.0
    %591 = vmatpush1.msra.mxu0 0.0
    %592 = vmatprep.subr.mxu0 0.0
    %593 = vmatpush1.msra.mxu0 0.0
    %594 = vmatprep.subr.mxu0 0.0
    %595 = vmatpush1.msra.mxu0 0.0
    %596 = vmatprep.subr.mxu0 0.0
    %597 = vmatpush1.msra.mxu0 0.0
    %598 = vmatprep.subr.mxu0 0.0
    %599 = vmatpush1.msra.mxu0 0.0
    %600 = vmatprep.subr.mxu0 0.0
    %601 = vmatpush1.msra.mxu0 0.0
    %602 = vmatprep.subr.mxu0 0.0
    %603 = vmatpush1.msra.mxu0 0.0
    %604 = vmatprep.subr.mxu0 0.0
    %605 = vmatpush1.msra.mxu0 0.0
    %606 = vmatprep.subr.mxu0 0.0
    %607 = vmatpush1.msra.mxu0 0.0
    %608 = vmatprep.subr.mxu0 0.0
    %609 = vmatpush1.msra.mxu0 0.0
    %610 = vmatprep.subr.mxu0 0.0
    %611 = vmatpush1.msra.mxu0 0.0
    %612 = vmatprep.subr.mxu0 0.0
    %613 = vmatpush1.msra.mxu0 0.0
    %614 = vmatprep.subr.mxu0 0.0
    %615 = vmatpush1.msra.mxu0 0.0
    %616 = vmatprep.subr.mxu0 0.0
    %617 = vmatpush1.msra.mxu0 0.0
    %618 = vmatprep.subr.mxu0 0.0
    %619 = vmatpush1.msra.mxu0 0.0
    %620 = vmatprep.subr.mxu0 0.0
    %621 = vmatpush1.msra.mxu0 0.0
    %622 = vmatprep.subr.mxu0 0.0
    %623 = vmatpush1.msra.mxu0 0.0
    %624 = vmatprep.subr.mxu0 0.0
    %625 = vmatpush1.msra.mxu0 0.0
    %626 = vmatprep.subr.mxu0 0.0
    %627 = vmatpush1.msra.mxu0 0.0
    %628 = vmatprep.subr.mxu0 0.0
    %629 = vmatpush1.msra.mxu0 0.0
    %630 = vmatprep.subr.mxu0 0.0
    %631 = vmatpush1.msra.mxu0 0.0
    %632 = vmatprep.subr.mxu0 0.0
    %633 = vmatpush1.msra.mxu0 0.0
    %634 = vmatprep.subr.mxu0 0.0
    %635 = vmatpush1.msra.mxu0 0.0
    %636 = vmatprep.subr.mxu0 0.0
    %637 = vmatpush1.msra.mxu0 0.0
    %638 = vmatprep.subr.mxu0 0.0
    %639 = vmatpush1.msra.mxu0 0.0
    %640 = vmatprep.subr.mxu0 0.0
    %641 = vmatpush1.msra.mxu0 0.0
    %642 = vmatprep.mubr.f32.mxu0 0.0
    %643 = vmatmul.mubr.f32.gmra.mrb[0].mxu0 %v569
    %v644 = vpop.f32.mrb[0].mxu0
    %v645 = vadd.f32 0.0, %v644
    %v646 = vpop.f32.mrb[0].mxu0
    %647 = vmatprep.mubr.f32.mxu0 0.0
    %648 = vmatmul.mubr.f32.gmra.mrb[0].mxu0 %v572
    %v649 = vpop.f32.mrb[0].mxu0
    %v650 = vadd.f32 0.0, %v649
    %v651 = vpop.f32.mrb[0].mxu0
    %652 = vmatprep.mubr.f32.mxu0 0.0
    %653 = vmatmul.mubr.f32.gmra.mrb[0].mxu0 %v574
    %v654 = vpop.f32.mrb[0].mxu0
    %v655 = vadd.f32 0.0, %v654
    %v656 = vpop.f32.mrb[0].mxu0
    %657 = vmatprep.mubr.f32.mxu0 0.0
    %658 = vmatmul.mubr.f32.gmra.mrb[0].mxu0 %v576
    %v659 = vpop.f32.mrb[0].mxu0
    %v660 = vadd.f32 0.0, %v659
    %v661 = vpop.f32.mrb[0].mxu0
    %662 = vdwg.mxu0
    %v663 = vadd.f32 %v560, %v645
    %v664 = vadd.f32 %v561, %v650
    %v665 = vadd.f32 %v562, %v655
    %v666 = vadd.f32 %v563, %v660
    %s667 = scalar_lea.vmem %s3, 4
    %v668 = vld [vmem:[%s667] sm:$0xf]
    %v669 = vsel %vm100, %v177, 0
    %v671 = vsel %vm100, %v182, 0
    %v673 = vsel %vm100, %v188, 0
    %v675 = vsel %vm100, %v190, 0
    %v678 = vsel %vm465, %v668, 0
    %680 = vmatprep.subr.mxu0 0.0
    %681 = vmatpush1.msra.mxu0 %v678
    %682 = vmatprep.subr.mxu0 0.0
    %683 = vmatpush1.msra.mxu0 0.0
    %684 = vmatprep.subr.mxu0 0.0
    %685 = vmatpush1.msra.mxu0 0.0
    %686 = vmatprep.subr.mxu0 0.0
    %687 = vmatpush1.msra.mxu0 0.0
    %688 = vmatprep.subr.mxu0 0.0
    %689 = vmatpush1.msra.mxu0 0.0
    %690 = vmatprep.subr.mxu0 0.0
    %691 = vmatpush1.msra.mxu0 0.0
    %692 = vmatprep.subr.mxu0 0.0
    %693 = vmatpush1.msra.mxu0 0.0
    %694 = vmatprep.subr.mxu0 0.0
    %695 = vmatpush1.msra.mxu0 0.0
    %696 = vmatprep.subr.mxu0 0.0
    %697 = vmatpush1.msra.mxu0 0.0
    %698 = vmatprep.subr.mxu0 0.0
    %699 = vmatpush1.msra.mxu0 0.0
    %700 = vmatprep.subr.mxu0 0.0
    %701 = vmatpush1.msra.mxu0 0.0
    %702 = vmatprep.subr.mxu0 0.0
    %703 = vmatpush1.msra.mxu0 0.0
    %704 = vmatprep.subr.mxu0 0.0
    %705 = vmatpush1.msra.mxu0 0.0
    %706 = vmatprep.subr.mxu0 0.0
    %707 = vmatpush1.msra.mxu0 0.0
    %708 = vmatprep.subr.mxu0 0.0
    %709 = vmatpush1.msra.mxu0 0.0
    %710 = vmatprep.subr.mxu0 0.0
    %711 = vmatpush1.msra.mxu0 0.0
    %712 = vmatprep.subr.mxu0 0.0
    %713 = vmatpush1.msra.mxu0 0.0
    %714 = vmatprep.subr.mxu0 0.0
    %715 = vmatpush1.msra.mxu0 0.0
    %716 = vmatprep.subr.mxu0 0.0
    %717 = vmatpush1.msra.mxu0 0.0
    %718 = vmatprep.subr.mxu0 0.0
    %719 = vmatpush1.msra.mxu0 0.0
    %720 = vmatprep.subr.mxu0 0.0
    %721 = vmatpush1.msra.mxu0 0.0
    %722 = vmatprep.subr.mxu0 0.0
    %723 = vmatpush1.msra.mxu0 0.0
    %724 = vmatprep.subr.mxu0 0.0
    %725 = vmatpush1.msra.mxu0 0.0
    %726 = vmatprep.subr.mxu0 0.0
    %727 = vmatpush1.msra.mxu0 0.0
    %728 = vmatprep.subr.mxu0 0.0
    %729 = vmatpush1.msra.mxu0 0.0
    %730 = vmatprep.subr.mxu0 0.0
    %731 = vmatpush1.msra.mxu0 0.0
    %732 = vmatprep.subr.mxu0 0.0
    %733 = vmatpush1.msra.mxu0 0.0
    %734 = vmatprep.subr.mxu0 0.0
    %735 = vmatpush1.msra.mxu0 0.0
    %736 = vmatprep.subr.mxu0 0.0
    %737 = vmatpush1.msra.mxu0 0.0
    %738 = vmatprep.subr.mxu0 0.0
    %739 = vmatpush1.msra.mxu0 0.0
    %740 = vmatprep.subr.mxu0 0.0
    %741 = vmatpush1.msra.mxu0 0.0
    %742 = vmatprep.subr.mxu0 0.0
    %743 = vmatpush1.msra.mxu0 0.0
    %744 = vmatprep.mubr.f32.mxu0 0.0
    %745 = vmatmul.mubr.f32.gmra.mrb[0].mxu0 %v669
    %v746 = vpop.f32.mrb[0].mxu0
    %v747 = vadd.f32 0.0, %v746
    %v748 = vpop.f32.mrb[0].mxu0
    %749 = vmatprep.mubr.f32.mxu0 0.0
    %750 = vmatmul.mubr.f32.gmra.mrb[0].mxu0 %v671
    %v751 = vpop.f32.mrb[0].mxu0
    %v752 = vadd.f32 0.0, %v751
    %v753 = vpop.f32.mrb[0].mxu0
    %754 = vmatprep.mubr.f32.mxu0 0.0
    %755 = vmatmul.mubr.f32.gmra.mrb[0].mxu0 %v673
    %v756 = vpop.f32.mrb[0].mxu0
    %v757 = vadd.f32 0.0, %v756
    %v758 = vpop.f32.mrb[0].mxu0
    %759 = vmatprep.mubr.f32.mxu0 0.0
    %760 = vmatmul.mubr.f32.gmra.mrb[0].mxu0 %v675
    %v761 = vpop.f32.mrb[0].mxu0
    %v762 = vadd.f32 0.0, %v761
    %v763 = vpop.f32.mrb[0].mxu0
    %764 = vdwg.mxu0
    %v765 = vadd.f32 %v663, %v747
    %v766 = vadd.f32 %v664, %v752
    %v767 = vadd.f32 %v665, %v757
    %v768 = vadd.f32 %v666, %v762
    %s769 = scalar_lea.vmem [#allocation2], 32
    %v770 = vld [vmem:[%s769] sm:$0xff]
    %v771 = vld [vmem:[%s769 + $0x8] sm:$0xff]
    %v772 = vld [vmem:[%s769 + $0x10] sm:$0xff]
    %v773 = vld [vmem:[%s769 + $0x18] sm:$0xff]
    %v774 = vsel %vm284, %v354, 0
    %v776 = vsel %vm284, %v359, 0
    %v778 = vsel %vm284, %v365, 0
    %v780 = vsel %vm284, %v367, 0
    %782 = vmatprep.subr.mxu0 0.0
    %783 = vmatpush1.msra.mxu0 %v770
    %784 = vmatprep.subr.mxu0 0.0
    %785 = vmatpush1.msra.mxu0 %v771
    %786 = vmatprep.subr.mxu0 0.0
    %787 = vmatpush1.msra.mxu0 %v772
    %788 = vmatprep.subr.mxu0 0.0
    %789 = vmatpush1.msra.mxu0 %v773
    %790 = vmatprep.subr.mxu0 0.0
    %791 = vmatpush1.msra.mxu0 0.0
    %792 = vmatprep.subr.mxu0 0.0
    %793 = vmatpush1.msra.mxu0 0.0
    %794 = vmatprep.subr.mxu0 0.0
    %795 = vmatpush1.msra.mxu0 0.0
    %796 = vmatprep.subr.mxu0 0.0
    %797 = vmatpush1.msra.mxu0 0.0
    %798 = vmatprep.subr.mxu0 0.0
    %799 = vmatpush1.msra.mxu0 0.0
    %800 = vmatprep.subr.mxu0 0.0
    %801 = vmatpush1.msra.mxu0 0.0
    %802 = vmatprep.subr.mxu0 0.0
    %803 = vmatpush1.msra.mxu0 0.0
    %804 = vmatprep.subr.mxu0 0.0
    %805 = vmatpush1.msra.mxu0 0.0
    %806 = vmatprep.subr.mxu0 0.0
    %807 = vmatpush1.msra.mxu0 0.0
    %808 = vmatprep.subr.mxu0 0.0
    %809 = vmatpush1.msra.mxu0 0.0
    %810 = vmatprep.subr.mxu0 0.0
    %811 = vmatpush1.msra.mxu0 0.0
    %812 = vmatprep.subr.mxu0 0.0
    %813 = vmatpush1.msra.mxu0 0.0
    %814 = vmatprep.subr.mxu0 0.0
    %815 = vmatpush1.msra.mxu0 0.0
    %816 = vmatprep.subr.mxu0 0.0
    %817 = vmatpush1.msra.mxu0 0.0
    %818 = vmatprep.subr.mxu0 0.0
    %819 = vmatpush1.msra.mxu0 0.0
    %820 = vmatprep.subr.mxu0 0.0
    %821 = vmatpush1.msra.mxu0 0.0
    %822 = vmatprep.subr.mxu0 0.0
    %823 = vmatpush1.msra.mxu0 0.0
    %824 = vmatprep.subr.mxu0 0.0
    %825 = vmatpush1.msra.mxu0 0.0
    %826 = vmatprep.subr.mxu0 0.0
    %827 = vmatpush1.msra.mxu0 0.0
    %828 = vmatprep.subr.mxu0 0.0
    %829 = vmatpush1.msra.mxu0 0.0
    %830 = vmatprep.subr.mxu0 0.0
    %831 = vmatpush1.msra.mxu0 0.0
    %832 = vmatprep.subr.mxu0 0.0
    %833 = vmatpush1.msra.mxu0 0.0
    %834 = vmatprep.subr.mxu0 0.0
    %835 = vmatpush1.msra.mxu0 0.0
    %836 = vmatprep.subr.mxu0 0.0
    %837 = vmatpush1.msra.mxu0 0.0
    %838 = vmatprep.subr.mxu0 0.0
    %839 = vmatpush1.msra.mxu0 0.0
    %840 = vmatprep.subr.mxu0 0.0
    %841 = vmatpush1.msra.mxu0 0.0
    %842 = vmatprep.subr.mxu0 0.0
    %843 = vmatpush1.msra.mxu0 0.0
    %844 = vmatprep.subr.mxu0 0.0
    %845 = vmatpush1.msra.mxu0 0.0
    %846 = vmatprep.mubr.f32.mxu0 0.0
    %847 = vmatmul.mubr.f32.gmra.mrb[0].mxu0 %v774
    %v848 = vpop.f32.mrb[0].mxu0
    %v849 = vadd.f32 0.0, %v848
    %v850 = vpop.f32.mrb[0].mxu0
    %851 = vmatprep.mubr.f32.mxu0 0.0
    %852 = vmatmul.mubr.f32.gmra.mrb[0].mxu0 %v776
    %v853 = vpop.f32.mrb[0].mxu0
    %v854 = vadd.f32 0.0, %v853
    %v855 = vpop.f32.mrb[0].mxu0
    %856 = vmatprep.mubr.f32.mxu0 0.0
    %857 = vmatmul.mubr.f32.gmra.mrb[0].mxu0 %v778
    %v858 = vpop.f32.mrb[0].mxu0
    %v859 = vadd.f32 0.0, %v858
    %v860 = vpop.f32.mrb[0].mxu0
    %861 = vmatprep.mubr.f32.mxu0 0.0
    %862 = vmatmul.mubr.f32.gmra.mrb[0].mxu0 %v780
    %v863 = vpop.f32.mrb[0].mxu0
    %v864 = vadd.f32 0.0, %v863
    %v865 = vpop.f32.mrb[0].mxu0
    %866 = vdwg.mxu0
    %v867 = vadd.f32 %v765, %v849
    %v868 = vadd.f32 %v766, %v854
    %v869 = vadd.f32 %v767, %v859
    %v870 = vadd.f32 %v768, %v864
    %s871 = scalar_lea.vmem %s3, 8
    %v872 = vld [vmem:[%s871] sm:$0xf]
    %v873 = vsel %vm100, %v268, 0
    %v875 = vsel %vm100, %v269, 0
    %v877 = vsel %vm100, %v273, 0
    %v879 = vsel %vm100, %v275, 0
    %v882 = vsel %vm465, %v872, 0
    %884 = vmatprep.subr.mxu0 0.0
    %885 = vmatpush1.msra.mxu0 %v882
    %886 = vmatprep.subr.mxu0 0.0
    %887 = vmatpush1.msra.mxu0 0.0
    %888 = vmatprep.subr.mxu0 0.0
    %889 = vmatpush1.msra.mxu0 0.0
    %890 = vmatprep.subr.mxu0 0.0
    %891 = vmatpush1.msra.mxu0 0.0
    %892 = vmatprep.subr.mxu0 0.0
    %893 = vmatpush1.msra.mxu0 0.0
    %894 = vmatprep.subr.mxu0 0.0
    %895 = vmatpush1.msra.mxu0 0.0
    %896 = vmatprep.subr.mxu0 0.0
    %897 = vmatpush1.msra.mxu0 0.0
    %898 = vmatprep.subr.mxu0 0.0
    %899 = vmatpush1.msra.mxu0 0.0
    %900 = vmatprep.subr.mxu0 0.0
    %901 = vmatpush1.msra.mxu0 0.0
    %902 = vmatprep.subr.mxu0 0.0
    %903 = vmatpush1.msra.mxu0 0.0
    %904 = vmatprep.subr.mxu0 0.0
    %905 = vmatpush1.msra.mxu0 0.0
    %906 = vmatprep.subr.mxu0 0.0
    %907 = vmatpush1.msra.mxu0 0.0
    %908 = vmatprep.subr.mxu0 0.0
    %909 = vmatpush1.msra.mxu0 0.0
    %910 = vmatprep.subr.mxu0 0.0
    %911 = vmatpush1.msra.mxu0 0.0
    %912 = vmatprep.subr.mxu0 0.0
    %913 = vmatpush1.msra.mxu0 0.0
    %914 = vmatprep.subr.mxu0 0.0
    %915 = vmatpush1.msra.mxu0 0.0
    %916 = vmatprep.subr.mxu0 0.0
    %917 = vmatpush1.msra.mxu0 0.0
    %918 = vmatprep.subr.mxu0 0.0
    %919 = vmatpush1.msra.mxu0 0.0
    %920 = vmatprep.subr.mxu0 0.0
    %921 = vmatpush1.msra.mxu0 0.0
    %922 = vmatprep.subr.mxu0 0.0
    %923 = vmatpush1.msra.mxu0 0.0
    %924 = vmatprep.subr.mxu0 0.0
    %925 = vmatpush1.msra.mxu0 0.0
    %926 = vmatprep.subr.mxu0 0.0
    %927 = vmatpush1.msra.mxu0 0.0
    %928 = vmatprep.subr.mxu0 0.0
    %929 = vmatpush1.msra.mxu0 0.0
    %930 = vmatprep.subr.mxu0 0.0
    %931 = vmatpush1.msra.mxu0 0.0
    %932 = vmatprep.subr.mxu0 0.0
    %933 = vmatpush1.msra.mxu0 0.0
    %934 = vmatprep.subr.mxu0 0.0
    %935 = vmatpush1.msra.mxu0 0.0
    %936 = vmatprep.subr.mxu0 0.0
    %937 = vmatpush1.msra.mxu0 0.0
    %938 = vmatprep.subr.mxu0 0.0
    %939 = vmatpush1.msra.mxu0 0.0
    %940 = vmatprep.subr.mxu0 0.0
    %941 = vmatpush1.msra.mxu0 0.0
    %942 = vmatprep.subr.mxu0 0.0
    %943 = vmatpush1.msra.mxu0 0.0
    %944 = vmatprep.subr.mxu0 0.0
    %945 = vmatpush1.msra.mxu0 0.0
    %946 = vmatprep.subr.mxu0 0.0
    %947 = vmatpush1.msra.mxu0 0.0
    %948 = vmatprep.mubr.f32.mxu0 0.0
    %949 = vmatmul.mubr.f32.gmra.mrb[0].mxu0 %v873
    %v950 = vpop.f32.mrb[0].mxu0
    %v951 = vadd.f32 0.0, %v950
    %v952 = vpop.f32.mrb[0].mxu0
    %953 = vmatprep.mubr.f32.mxu0 0.0
    %954 = vmatmul.mubr.f32.gmra.mrb[0].mxu0 %v875
    %v955 = vpop.f32.mrb[0].mxu0
    %v956 = vadd.f32 0.0, %v955
    %v957 = vpop.f32.mrb[0].mxu0
    %958 = vmatprep.mubr.f32.mxu0 0.0
    %959 = vmatmul.mubr.f32.gmra.mrb[0].mxu0 %v877
    %v960 = vpop.f32.mrb[0].mxu0
    %v961 = vadd.f32 0.0, %v960
    %v962 = vpop.f32.mrb[0].mxu0
    %963 = vmatprep.mubr.f32.mxu0 0.0
    %964 = vmatmul.mubr.f32.gmra.mrb[0].mxu0 %v879
    %v965 = vpop.f32.mrb[0].mxu0
    %v966 = vadd.f32 0.0, %v965
    %v967 = vpop.f32.mrb[0].mxu0
    %968 = vdwg.mxu0
    %v969 = vadd.f32 %v867, %v951
    %v970 = vadd.f32 %v868, %v956
    %v971 = vadd.f32 %v869, %v961
    %v972 = vadd.f32 %v870, %v966
    %s973 = scalar_lea.vmem [#allocation2], 64
    %v974 = vld [vmem:[%s973] sm:$0xff]
    %v975 = vld [vmem:[%s973 + $0x8] sm:$0xff]
    %v976 = vld [vmem:[%s973 + $0x10] sm:$0xff]
    %v977 = vld [vmem:[%s973 + $0x18] sm:$0xff]
    %v978 = vsel %vm284, %v445, 0
    %v980 = vsel %vm284, %v446, 0
    %v982 = vsel %vm284, %v450, 0
    %v984 = vsel %vm284, %v452, 0
    %986 = vmatprep.subr.mxu0 0.0
    %987 = vmatpush1.msra.mxu0 %v974
    %988 = vmatprep.subr.mxu0 0.0
    %989 = vmatpush1.msra.mxu0 %v975
    %990 = vmatprep.subr.mxu0 0.0
    %991 = vmatpush1.msra.mxu0 %v976
    %992 = vmatprep.subr.mxu0 0.0
    %993 = vmatpush1.msra.mxu0 %v977
    %994 = vmatprep.subr.mxu0 0.0
    %995 = vmatpush1.msra.mxu0 0.0
    %996 = vmatprep.subr.mxu0 0.0
    %997 = vmatpush1.msra.mxu0 0.0
    %998 = vmatprep.subr.mxu0 0.0
    %999 = vmatpush1.msra.mxu0 0.0
    %1000 = vmatprep.subr.mxu0 0.0
    %1001 = vmatpush1.msra.mxu0 0.0
    %1002 = vmatprep.subr.mxu0 0.0
    %1003 = vmatpush1.msra.mxu0 0.0
    %1004 = vmatprep.subr.mxu0 0.0
    %1005 = vmatpush1.msra.mxu0 0.0
    %1006 = vmatprep.subr.mxu0 0.0
    %1007 = vmatpush1.msra.mxu0 0.0
    %1008 = vmatprep.subr.mxu0 0.0
    %1009 = vmatpush1.msra.mxu0 0.0
    %1010 = vmatprep.subr.mxu0 0.0
    %1011 = vmatpush1.msra.mxu0 0.0
    %1012 = vmatprep.subr.mxu0 0.0
    %1013 = vmatpush1.msra.mxu0 0.0
    %1014 = vmatprep.subr.mxu0 0.0
    %1015 = vmatpush1.msra.mxu0 0.0
    %1016 = vmatprep.subr.mxu0 0.0
    %1017 = vmatpush1.msra.mxu0 0.0
    %1018 = vmatprep.subr.mxu0 0.0
    %1019 = vmatpush1.msra.mxu0 0.0
    %1020 = vmatprep.subr.mxu0 0.0
    %1021 = vmatpush1.msra.mxu0 0.0
    %1022 = vmatprep.subr.mxu0 0.0
    %1023 = vmatpush1.msra.mxu0 0.0
    %1024 = vmatprep.subr.mxu0 0.0
    %1025 = vmatpush1.msra.mxu0 0.0
    %1026 = vmatprep.subr.mxu0 0.0
    %1027 = vmatpush1.msra.mxu0 0.0
    %1028 = vmatprep.subr.mxu0 0.0
    %1029 = vmatpush1.msra.mxu0 0.0
    %1030 = vmatprep.subr.mxu0 0.0
    %1031 = vmatpush1.msra.mxu0 0.0
    %1032 = vmatprep.subr.mxu0 0.0
    %1033 = vmatpush1.msra.mxu0 0.0
    %1034 = vmatprep.subr.mxu0 0.0
    %1035 = vmatpush1.msra.mxu0 0.0
    %1036 = vmatprep.subr.mxu0 0.0
    %1037 = vmatpush1.msra.mxu0 0.0
    %1038 = vmatprep.subr.mxu0 0.0
    %1039 = vmatpush1.msra.mxu0 0.0
    %1040 = vmatprep.subr.mxu0 0.0
    %1041 = vmatpush1.msra.mxu0 0.0
    %1042 = vmatprep.subr.mxu0 0.0
    %1043 = vmatpush1.msra.mxu0 0.0
    %1044 = vmatprep.subr.mxu0 0.0
    %1045 = vmatpush1.msra.mxu0 0.0
    %1046 = vmatprep.subr.mxu0 0.0
    %1047 = vmatpush1.msra.mxu0 0.0
    %1048 = vmatprep.subr.mxu0 0.0
    %1049 = vmatpush1.msra.mxu0 0.0
    %1050 = vmatprep.mubr.f32.mxu0 0.0
    %1051 = vmatmul.mubr.f32.gmra.mrb[0].mxu0 %v978
    %v1052 = vpop.f32.mrb[0].mxu0
    %v1053 = vadd.f32 0.0, %v1052
    %v1054 = vpop.f32.mrb[0].mxu0
    %1055 = vmatprep.mubr.f32.mxu0 0.0
    %1056 = vmatmul.mubr.f32.gmra.mrb[0].mxu0 %v980
    %v1057 = vpop.f32.mrb[0].mxu0
    %v1058 = vadd.f32 0.0, %v1057
    %v1059 = vpop.f32.mrb[0].mxu0
    %1060 = vmatprep.mubr.f32.mxu0 0.0
    %1061 = vmatmul.mubr.f32.gmra.mrb[0].mxu0 %v982
    %v1062 = vpop.f32.mrb[0].mxu0
    %v1063 = vadd.f32 0.0, %v1062
    %v1064 = vpop.f32.mrb[0].mxu0
    %1065 = vmatprep.mubr.f32.mxu0 0.0
    %1066 = vmatmul.mubr.f32.gmra.mrb[0].mxu0 %v984
    %v1067 = vpop.f32.mrb[0].mxu0
    %v1068 = vadd.f32 0.0, %v1067
    %v1069 = vpop.f32.mrb[0].mxu0
    %1070 = vdwg.mxu0
    %v1071 = vadd.f32 %v969, %v1053
    %v1072 = vadd.f32 %v970, %v1058
    %v1073 = vadd.f32 %v971, %v1063
    %v1074 = vadd.f32 %v972, %v1068
    %v1075 = vxor.u32 %v1071, 2147483648
    %v1076 = vxor.u32 %v1072, 2147483648
    %v1077 = vxor.u32 %v1073, 2147483648
    %v1078 = vxor.u32 %v1074, 2147483648
    %v1079 = vmul.f32 %v1075, 1.442695
    %v1080 = vpow.pop %v1079
    %v1081 = vmul.f32 %v1076, 1.442695
    %v1082 = vpow.pop %v1081
    %v1083 = vmul.f32 %v1077, 1.442695
    %v1084 = vpow.pop %v1083
    %v1085 = vmul.f32 %v1078, 1.442695
    %v1086 = vpow.pop %v1085
    %v1087 = vadd.f32 %v1080, 1.0
    %v1088 = vadd.f32 %v1082, 1.0
    %v1089 = vadd.f32 %v1084, 1.0
    %v1090 = vadd.f32 %v1086, 1.0
    %v1091 = vrcp.pop %v1087
    %v1092 = vmul.f32 1.0, %v1091
    %v1093 = vrcp.pop %v1088
    %v1094 = vmul.f32 1.0, %v1093
    %v1095 = vrcp.pop %v1089
    %v1096 = vmul.f32 1.0, %v1095
    %v1097 = vrcp.pop %v1090
    %v1098 = vmul.f32 1.0, %v1097
    %v1099 = vld [vmem:[%s10] sm:$0x1]
    %v1100 = vld [vmem:[%s5] sm:$0xf]
    %v1102 = vsel %vm465, %v1100, 0
    %1104 = vmatprep.subr.mxu0 0.0
    %1105 = vmatpush1.msra.mxu0 %v1102
    %1106 = vmatprep.subr.mxu0 0.0
    %1107 = vmatpush1.msra.mxu0 0.0
    %1108 = vmatprep.subr.mxu0 0.0
    %1109 = vmatpush1.msra.mxu0 0.0
    %1110 = vmatprep.subr.mxu0 0.0
    %1111 = vmatpush1.msra.mxu0 0.0
    %1112 = vmatprep.subr.mxu0 0.0
    %1113 = vmatpush1.msra.mxu0 0.0
    %1114 = vmatprep.subr.mxu0 0.0
    %1115 = vmatpush1.msra.mxu0 0.0
    %1116 = vmatprep.subr.mxu0 0.0
    %1117 = vmatpush1.msra.mxu0 0.0
    %1118 = vmatprep.subr.mxu0 0.0
    %1119 = vmatpush1.msra.mxu0 0.0
    %1120 = vmatprep.subr.mxu0 0.0
    %1121 = vmatpush1.msra.mxu0 0.0
    %1122 = vmatprep.subr.mxu0 0.0
    %1123 = vmatpush1.msra.mxu0 0.0
    %1124 = vmatprep.subr.mxu0 0.0
    %1125 = vmatpush1.msra.mxu0 0.0
    %1126 = vmatprep.subr.mxu0 0.0
    %1127 = vmatpush1.msra.mxu0 0.0
    %1128 = vmatprep.subr.mxu0 0.0
    %1129 = vmatpush1.msra.mxu0 0.0
    %1130 = vmatprep.subr.mxu0 0.0
    %1131 = vmatpush1.msra.mxu0 0.0
    %1132 = vmatprep.subr.mxu0 0.0
    %1133 = vmatpush1.msra.mxu0 0.0
    %1134 = vmatprep.subr.mxu0 0.0
    %1135 = vmatpush1.msra.mxu0 0.0
    %1136 = vmatprep.subr.mxu0 0.0
    %1137 = vmatpush1.msra.mxu0 0.0
    %1138 = vmatprep.subr.mxu0 0.0
    %1139 = vmatpush1.msra.mxu0 0.0
    %1140 = vmatprep.subr.mxu0 0.0
    %1141 = vmatpush1.msra.mxu0 0.0
    %1142 = vmatprep.subr.mxu0 0.0
    %1143 = vmatpush1.msra.mxu0 0.0
    %1144 = vmatprep.subr.mxu0 0.0
    %1145 = vmatpush1.msra.mxu0 0.0
    %1146 = vmatprep.subr.mxu0 0.0
    %1147 = vmatpush1.msra.mxu0 0.0
    %1148 = vmatprep.subr.mxu0 0.0
    %1149 = vmatpush1.msra.mxu0 0.0
    %1150 = vmatprep.subr.mxu0 0.0
    %1151 = vmatpush1.msra.mxu0 0.0
    %1152 = vmatprep.subr.mxu0 0.0
    %1153 = vmatpush1.msra.mxu0 0.0
    %1154 = vmatprep.subr.mxu0 0.0
    %1155 = vmatpush1.msra.mxu0 0.0
    %1156 = vmatprep.subr.mxu0 0.0
    %1157 = vmatpush1.msra.mxu0 0.0
    %1158 = vmatprep.subr.mxu0 0.0
    %1159 = vmatpush1.msra.mxu0 0.0
    %1160 = vmatprep.subr.mxu0 0.0
    %1161 = vmatpush1.msra.mxu0 0.0
    %1162 = vmatprep.subr.mxu0 0.0
    %1163 = vmatpush1.msra.mxu0 0.0
    %1164 = vmatprep.subr.mxu0 0.0
    %1165 = vmatpush1.msra.mxu0 0.0
    %1166 = vmatprep.subr.mxu0 0.0
    %1167 = vmatpush1.msra.mxu0 0.0
    %1168 = vmatprep.mubr.f32.mxu0 0.0
    %1169 = vmatmul.mubr.f32.gmra.mrb[0].mxu0 %v456
    %v1170 = vpop.f32.mrb[0].mxu0
    %v1171 = vadd.f32 0.0, %v1170
    %v1172 = vpop.f32.mrb[0].mxu0
    %1173 = vmatprep.mubr.f32.mxu0 0.0
    %1174 = vmatmul.mubr.f32.gmra.mrb[0].mxu0 %v459
    %v1175 = vpop.f32.mrb[0].mxu0
    %v1176 = vadd.f32 0.0, %v1175
    %v1177 = vpop.f32.mrb[0].mxu0
    %1178 = vmatprep.mubr.f32.mxu0 0.0
    %1179 = vmatmul.mubr.f32.gmra.mrb[0].mxu0 %v461
    %v1180 = vpop.f32.mrb[0].mxu0
    %v1181 = vadd.f32 0.0, %v1180
    %v1182 = vpop.f32.mrb[0].mxu0
    %1183 = vmatprep.mubr.f32.mxu0 0.0
    %1184 = vmatmul.mubr.f32.gmra.mrb[0].mxu0 %v463
    %v1185 = vpop.f32.mrb[0].mxu0
    %v1186 = vadd.f32 0.0, %v1185
    %v1187 = vpop.f32.mrb[0].mxu0
    %1188 = vdwg.mxu0
    %v1190 = vlaneseq
    %v1191 = vshrl.u32 %v1190, 7
    %v1192 = vsub.s32 0, %v1191
    %v1193 = vrot.slane %v1099, %v1192
    %v1195 = vadd.f32 %v1193, %v1171
    %v1196 = vadd.f32 %v1193, %v1176
    %v1197 = vadd.f32 %v1193, %v1181
    %v1198 = vadd.f32 %v1193, %v1186
    %v1199 = vld [vmem:[#allocation4] sm:$0xff]
    %v1200 = vld [vmem:[#allocation4 + $0x8] sm:$0xff]
    %v1201 = vld [vmem:[#allocation4 + $0x10] sm:$0xff]
    %v1202 = vld [vmem:[#allocation4 + $0x18] sm:$0xff]
    %1203 = vmatprep.subr.mxu0 0.0
    %1204 = vmatpush1.msra.mxu0 %v1199
    %1205 = vmatprep.subr.mxu0 0.0
    %1206 = vmatpush1.msra.mxu0 %v1200
    %1207 = vmatprep.subr.mxu0 0.0
    %1208 = vmatpush1.msra.mxu0 %v1201
    %1209 = vmatprep.subr.mxu0 0.0
    %1210 = vmatpush1.msra.mxu0 %v1202
    %1211 = vmatprep.subr.mxu0 0.0
    %1212 = vmatpush1.msra.mxu0 0.0
    %1213 = vmatprep.subr.mxu0 0.0
    %1214 = vmatpush1.msra.mxu0 0.0
    %1215 = vmatprep.subr.mxu0 0.0
    %1216 = vmatpush1.msra.mxu0 0.0
    %1217 = vmatprep.subr.mxu0 0.0
    %1218 = vmatpush1.msra.mxu0 0.0
    %1219 = vmatprep.subr.mxu0 0.0
    %1220 = vmatpush1.msra.mxu0 0.0
    %1221 = vmatprep.subr.mxu0 0.0
    %1222 = vmatpush1.msra.mxu0 0.0
    %1223 = vmatprep.subr.mxu0 0.0
    %1224 = vmatpush1.msra.mxu0 0.0
    %1225 = vmatprep.subr.mxu0 0.0
    %1226 = vmatpush1.msra.mxu0 0.0
    %1227 = vmatprep.subr.mxu0 0.0
    %1228 = vmatpush1.msra.mxu0 0.0
    %1229 = vmatprep.subr.mxu0 0.0
    %1230 = vmatpush1.msra.mxu0 0.0
    %1231 = vmatprep.subr.mxu0 0.0
    %1232 = vmatpush1.msra.mxu0 0.0
    %1233 = vmatprep.subr.mxu0 0.0
    %1234 = vmatpush1.msra.mxu0 0.0
    %1235 = vmatprep.subr.mxu0 0.0
    %1236 = vmatpush1.msra.mxu0 0.0
    %1237 = vmatprep.subr.mxu0 0.0
    %1238 = vmatpush1.msra.mxu0 0.0
    %1239 = vmatprep.subr.mxu0 0.0
    %1240 = vmatpush1.msra.mxu0 0.0
    %1241 = vmatprep.subr.mxu0 0.0
    %1242 = vmatpush1.msra.mxu0 0.0
    %1243 = vmatprep.subr.mxu0 0.0
    %1244 = vmatpush1.msra.mxu0 0.0
    %1245 = vmatprep.subr.mxu0 0.0
    %1246 = vmatpush1.msra.mxu0 0.0
    %1247 = vmatprep.subr.mxu0 0.0
    %1248 = vmatpush1.msra.mxu0 0.0
    %1249 = vmatprep.subr.mxu0 0.0
    %1250 = vmatpush1.msra.mxu0 0.0
    %1251 = vmatprep.subr.mxu0 0.0
    %1252 = vmatpush1.msra.mxu0 0.0
    %1253 = vmatprep.subr.mxu0 0.0
    %1254 = vmatpush1.msra.mxu0 0.0
    %1255 = vmatprep.subr.mxu0 0.0
    %1256 = vmatpush1.msra.mxu0 0.0
    %1257 = vmatprep.subr.mxu0 0.0
    %1258 = vmatpush1.msra.mxu0 0.0
    %1259 = vmatprep.subr.mxu0 0.0
    %1260 = vmatpush1.msra.mxu0 0.0
    %1261 = vmatprep.subr.mxu0 0.0
    %1262 = vmatpush1.msra.mxu0 0.0
    %1263 = vmatprep.subr.mxu0 0.0
    %1264 = vmatpush1.msra.mxu0 0.0
    %1265 = vmatprep.subr.mxu0 0.0
    %1266 = vmatpush1.msra.mxu0 0.0
    %1267 = vmatprep.mubr.f32.mxu0 0.0
    %1268 = vmatmul.mubr.f32.gmra.mrb[0].mxu0 %v569
    %v1269 = vpop.f32.mrb[0].mxu0
    %v1270 = vadd.f32 0.0, %v1269
    %v1271 = vpop.f32.mrb[0].mxu0
    %1272 = vmatprep.mubr.f32.mxu0 0.0
    %1273 = vmatmul.mubr.f32.gmra.mrb[0].mxu0 %v572
    %v1274 = vpop.f32.mrb[0].mxu0
    %v1275 = vadd.f32 0.0, %v1274
    %v1276 = vpop.f32.mrb[0].mxu0
    %1277 = vmatprep.mubr.f32.mxu0 0.0
    %1278 = vmatmul.mubr.f32.gmra.mrb[0].mxu0 %v574
    %v1279 = vpop.f32.mrb[0].mxu0
    %v1280 = vadd.f32 0.0, %v1279
    %v1281 = vpop.f32.mrb[0].mxu0
    %1282 = vmatprep.mubr.f32.mxu0 0.0
    %1283 = vmatmul.mubr.f32.gmra.mrb[0].mxu0 %v576
    %v1284 = vpop.f32.mrb[0].mxu0
    %v1285 = vadd.f32 0.0, %v1284
    %v1286 = vpop.f32.mrb[0].mxu0
    %1287 = vdwg.mxu0
    %v1288 = vadd.f32 %v1195, %v1270
    %v1289 = vadd.f32 %v1196, %v1275
    %v1290 = vadd.f32 %v1197, %v1280
    %v1291 = vadd.f32 %v1198, %v1285
    %s1292 = scalar_lea.vmem %s5, 4
    %v1293 = vld [vmem:[%s1292] sm:$0xf]
    %v1295 = vsel %vm465, %v1293, 0
    %1297 = vmatprep.subr.mxu0 0.0
    %1298 = vmatpush1.msra.mxu0 %v1295
    %1299 = vmatprep.subr.mxu0 0.0
    %1300 = vmatpush1.msra.mxu0 0.0
    %1301 = vmatprep.subr.mxu0 0.0
    %1302 = vmatpush1.msra.mxu0 0.0
    %1303 = vmatprep.subr.mxu0 0.0
    %1304 = vmatpush1.msra.mxu0 0.0
    %1305 = vmatprep.subr.mxu0 0.0
    %1306 = vmatpush1.msra.mxu0 0.0
    %1307 = vmatprep.subr.mxu0 0.0
    %1308 = vmatpush1.msra.mxu0 0.0
    %1309 = vmatprep.subr.mxu0 0.0
    %1310 = vmatpush1.msra.mxu0 0.0
    %1311 = vmatprep.subr.mxu0 0.0
    %1312 = vmatpush1.msra.mxu0 0.0
    %1313 = vmatprep.subr.mxu0 0.0
    %1314 = vmatpush1.msra.mxu0 0.0
    %1315 = vmatprep.subr.mxu0 0.0
    %1316 = vmatpush1.msra.mxu0 0.0
    %1317 = vmatprep.subr.mxu0 0.0
    %1318 = vmatpush1.msra.mxu0 0.0
    %1319 = vmatprep.subr.mxu0 0.0
    %1320 = vmatpush1.msra.mxu0 0.0
    %1321 = vmatprep.subr.mxu0 0.0
    %1322 = vmatpush1.msra.mxu0 0.0
    %1323 = vmatprep.subr.mxu0 0.0
    %1324 = vmatpush1.msra.mxu0 0.0
    %1325 = vmatprep.subr.mxu0 0.0
    %1326 = vmatpush1.msra.mxu0 0.0
    %1327 = vmatprep.subr.mxu0 0.0
    %1328 = vmatpush1.msra.mxu0 0.0
    %1329 = vmatprep.subr.mxu0 0.0
    %1330 = vmatpush1.msra.mxu0 0.0
    %1331 = vmatprep.subr.mxu0 0.0
    %1332 = vmatpush1.msra.mxu0 0.0
    %1333 = vmatprep.subr.mxu0 0.0
    %1334 = vmatpush1.msra.mxu0 0.0
    %1335 = vmatprep.subr.mxu0 0.0
    %1336 = vmatpush1.msra.mxu0 0.0
    %1337 = vmatprep.subr.mxu0 0.0
    %1338 = vmatpush1.msra.mxu0 0.0
    %1339 = vmatprep.subr.mxu0 0.0
    %1340 = vmatpush1.msra.mxu0 0.0
    %1341 = vmatprep.subr.mxu0 0.0
    %1342 = vmatpush1.msra.mxu0 0.0
    %1343 = vmatprep.subr.mxu0 0.0
    %1344 = vmatpush1.msra.mxu0 0.0
    %1345 = vmatprep.subr.mxu0 0.0
    %1346 = vmatpush1.msra.mxu0 0.0
    %1347 = vmatprep.subr.mxu0 0.0
    %1348 = vmatpush1.msra.mxu0 0.0
    %1349 = vmatprep.subr.mxu0 0.0
    %1350 = vmatpush1.msra.mxu0 0.0
    %1351 = vmatprep.subr.mxu0 0.0
    %1352 = vmatpush1.msra.mxu0 0.0
    %1353 = vmatprep.subr.mxu0 0.0
    %1354 = vmatpush1.msra.mxu0 0.0
    %1355 = vmatprep.subr.mxu0 0.0
    %1356 = vmatpush1.msra.mxu0 0.0
    %1357 = vmatprep.subr.mxu0 0.0
    %1358 = vmatpush1.msra.mxu0 0.0
    %1359 = vmatprep.subr.mxu0 0.0
    %1360 = vmatpush1.msra.mxu0 0.0
    %1361 = vmatprep.mubr.f32.mxu0 0.0
    %1362 = vmatmul.mubr.f32.gmra.mrb[0].mxu0 %v669
    %v1363 = vpop.f32.mrb[0].mxu0
    %v1364 = vadd.f32 0.0, %v1363
    %v1365 = vpop.f32.mrb[0].mxu0
    %1366 = vmatprep.mubr.f32.mxu0 0.0
    %1367 = vmatmul.mubr.f32.gmra.mrb[0].mxu0 %v671
    %v1368 = vpop.f32.mrb[0].mxu0
    %v1369 = vadd.f32 0.0, %v1368
    %v1370 = vpop.f32.mrb[0].mxu0
    %1371 = vmatprep.mubr.f32.mxu0 0.0
    %1372 = vmatmul.mubr.f32.gmra.mrb[0].mxu0 %v673
    %v1373 = vpop.f32.mrb[0].mxu0
    %v1374 = vadd.f32 0.0, %v1373
    %v1375 = vpop.f32.mrb[0].mxu0
    %1376 = vmatprep.mubr.f32.mxu0 0.0
    %1377 = vmatmul.mubr.f32.gmra.mrb[0].mxu0 %v675
    %v1378 = vpop.f32.mrb[0].mxu0
    %v1379 = vadd.f32 0.0, %v1378
    %v1380 = vpop.f32.mrb[0].mxu0
    %1381 = vdwg.mxu0
    %v1382 = vadd.f32 %v1288, %v1364
    %v1383 = vadd.f32 %v1289, %v1369
    %v1384 = vadd.f32 %v1290, %v1374
    %v1385 = vadd.f32 %v1291, %v1379
    %s1386 = scalar_lea.vmem [#allocation4], 32
    %v1387 = vld [vmem:[%s1386] sm:$0xff]
    %v1388 = vld [vmem:[%s1386 + $0x8] sm:$0xff]
    %v1389 = vld [vmem:[%s1386 + $0x10] sm:$0xff]
    %v1390 = vld [vmem:[%s1386 + $0x18] sm:$0xff]
    %1391 = vmatprep.subr.mxu0 0.0
    %1392 = vmatpush1.msra.mxu0 %v1387
    %1393 = vmatprep.subr.mxu0 0.0
    %1394 = vmatpush1.msra.mxu0 %v1388
    %1395 = vmatprep.subr.mxu0 0.0
    %1396 = vmatpush1.msra.mxu0 %v1389
    %1397 = vmatprep.subr.mxu0 0.0
    %1398 = vmatpush1.msra.mxu0 %v1390
    %1399 = vmatprep.subr.mxu0 0.0
    %1400 = vmatpush1.msra.mxu0 0.0
    %1401 = vmatprep.subr.mxu0 0.0
    %1402 = vmatpush1.msra.mxu0 0.0
    %1403 = vmatprep.subr.mxu0 0.0
    %1404 = vmatpush1.msra.mxu0 0.0
    %1405 = vmatprep.subr.mxu0 0.0
    %1406 = vmatpush1.msra.mxu0 0.0
    %1407 = vmatprep.subr.mxu0 0.0
    %1408 = vmatpush1.msra.mxu0 0.0
    %1409 = vmatprep.subr.mxu0 0.0
    %1410 = vmatpush1.msra.mxu0 0.0
    %1411 = vmatprep.subr.mxu0 0.0
    %1412 = vmatpush1.msra.mxu0 0.0
    %1413 = vmatprep.subr.mxu0 0.0
    %1414 = vmatpush1.msra.mxu0 0.0
    %1415 = vmatprep.subr.mxu0 0.0
    %1416 = vmatpush1.msra.mxu0 0.0
    %1417 = vmatprep.subr.mxu0 0.0
    %1418 = vmatpush1.msra.mxu0 0.0
    %1419 = vmatprep.subr.mxu0 0.0
    %1420 = vmatpush1.msra.mxu0 0.0
    %1421 = vmatprep.subr.mxu0 0.0
    %1422 = vmatpush1.msra.mxu0 0.0
    %1423 = vmatprep.subr.mxu0 0.0
    %1424 = vmatpush1.msra.mxu0 0.0
    %1425 = vmatprep.subr.mxu0 0.0
    %1426 = vmatpush1.msra.mxu0 0.0
    %1427 = vmatprep.subr.mxu0 0.0
    %1428 = vmatpush1.msra.mxu0 0.0
    %1429 = vmatprep.subr.mxu0 0.0
    %1430 = vmatpush1.msra.mxu0 0.0
    %1431 = vmatprep.subr.mxu0 0.0
    %1432 = vmatpush1.msra.mxu0 0.0
    %1433 = vmatprep.subr.mxu0 0.0
    %1434 = vmatpush1.msra.mxu0 0.0
    %1435 = vmatprep.subr.mxu0 0.0
    %1436 = vmatpush1.msra.mxu0 0.0
    %1437 = vmatprep.subr.mxu0 0.0
    %1438 = vmatpush1.msra.mxu0 0.0
    %1439 = vmatprep.subr.mxu0 0.0
    %1440 = vmatpush1.msra.mxu0 0.0
    %1441 = vmatprep.subr.mxu0 0.0
    %1442 = vmatpush1.msra.mxu0 0.0
    %1443 = vmatprep.subr.mxu0 0.0
    %1444 = vmatpush1.msra.mxu0 0.0
    %1445 = vmatprep.subr.mxu0 0.0
    %1446 = vmatpush1.msra.mxu0 0.0
    %1447 = vmatprep.subr.mxu0 0.0
    %1448 = vmatpush1.msra.mxu0 0.0
    %1449 = vmatprep.subr.mxu0 0.0
    %1450 = vmatpush1.msra.mxu0 0.0
    %1451 = vmatprep.subr.mxu0 0.0
    %1452 = vmatpush1.msra.mxu0 0.0
    %1453 = vmatprep.subr.mxu0 0.0
    %1454 = vmatpush1.msra.mxu0 0.0
    %1455 = vmatprep.mubr.f32.mxu0 0.0
    %1456 = vmatmul.mubr.f32.gmra.mrb[0].mxu0 %v774
    %v1457 = vpop.f32.mrb[0].mxu0
    %v1458 = vadd.f32 0.0, %v1457
    %v1459 = vpop.f32.mrb[0].mxu0
    %1460 = vmatprep.mubr.f32.mxu0 0.0
    %1461 = vmatmul.mubr.f32.gmra.mrb[0].mxu0 %v776
    %v1462 = vpop.f32.mrb[0].mxu0
    %v1463 = vadd.f32 0.0, %v1462
    %v1464 = vpop.f32.mrb[0].mxu0
    %1465 = vmatprep.mubr.f32.mxu0 0.0
    %1466 = vmatmul.mubr.f32.gmra.mrb[0].mxu0 %v778
    %v1467 = vpop.f32.mrb[0].mxu0
    %v1468 = vadd.f32 0.0, %v1467
    %v1469 = vpop.f32.mrb[0].mxu0
    %1470 = vmatprep.mubr.f32.mxu0 0.0
    %1471 = vmatmul.mubr.f32.gmra.mrb[0].mxu0 %v780
    %v1472 = vpop.f32.mrb[0].mxu0
    %v1473 = vadd.f32 0.0, %v1472
    %v1474 = vpop.f32.mrb[0].mxu0
    %1475 = vdwg.mxu0
    %v1476 = vadd.f32 %v1382, %v1458
    %v1477 = vadd.f32 %v1383, %v1463
    %v1478 = vadd.f32 %v1384, %v1468
    %v1479 = vadd.f32 %v1385, %v1473
    %s1480 = scalar_lea.vmem %s5, 8
    %v1481 = vld [vmem:[%s1480] sm:$0xf]
    %v1483 = vsel %vm465, %v1481, 0
    %1485 = vmatprep.subr.mxu0 0.0
    %1486 = vmatpush1.msra.mxu0 %v1483
    %1487 = vmatprep.subr.mxu0 0.0
    %1488 = vmatpush1.msra.mxu0 0.0
    %1489 = vmatprep.subr.mxu0 0.0
    %1490 = vmatpush1.msra.mxu0 0.0
    %1491 = vmatprep.subr.mxu0 0.0
    %1492 = vmatpush1.msra.mxu0 0.0
    %1493 = vmatprep.subr.mxu0 0.0
    %1494 = vmatpush1.msra.mxu0 0.0
    %1495 = vmatprep.subr.mxu0 0.0
    %1496 = vmatpush1.msra.mxu0 0.0
    %1497 = vmatprep.subr.mxu0 0.0
    %1498 = vmatpush1.msra.mxu0 0.0
    %1499 = vmatprep.subr.mxu0 0.0
    %1500 = vmatpush1.msra.mxu0 0.0
    %1501 = vmatprep.subr.mxu0 0.0
    %1502 = vmatpush1.msra.mxu0 0.0
    %1503 = vmatprep.subr.mxu0 0.0
    %1504 = vmatpush1.msra.mxu0 0.0
    %1505 = vmatprep.subr.mxu0 0.0
    %1506 = vmatpush1.msra.mxu0 0.0
    %1507 = vmatprep.subr.mxu0 0.0
    %1508 = vmatpush1.msra.mxu0 0.0
    %1509 = vmatprep.subr.mxu0 0.0
    %1510 = vmatpush1.msra.mxu0 0.0
    %1511 = vmatprep.subr.mxu0 0.0
    %1512 = vmatpush1.msra.mxu0 0.0
    %1513 = vmatprep.subr.mxu0 0.0
    %1514 = vmatpush1.msra.mxu0 0.0
    %1515 = vmatprep.subr.mxu0 0.0
    %1516 = vmatpush1.msra.mxu0 0.0
    %1517 = vmatprep.subr.mxu0 0.0
    %1518 = vmatpush1.msra.mxu0 0.0
    %1519 = vmatprep.subr.mxu0 0.0
    %1520 = vmatpush1.msra.mxu0 0.0
    %1521 = vmatprep.subr.mxu0 0.0
    %1522 = vmatpush1.msra.mxu0 0.0
    %1523 = vmatprep.subr.mxu0 0.0
    %1524 = vmatpush1.msra.mxu0 0.0
    %1525 = vmatprep.subr.mxu0 0.0
    %1526 = vmatpush1.msra.mxu0 0.0
    %1527 = vmatprep.subr.mxu0 0.0
    %1528 = vmatpush1.msra.mxu0 0.0
    %1529 = vmatprep.subr.mxu0 0.0
    %1530 = vmatpush1.msra.mxu0 0.0
    %1531 = vmatprep.subr.mxu0 0.0
    %1532 = vmatpush1.msra.mxu0 0.0
    %1533 = vmatprep.subr.mxu0 0.0
    %1534 = vmatpush1.msra.mxu0 0.0
    %1535 = vmatprep.subr.mxu0 0.0
    %1536 = vmatpush1.msra.mxu0 0.0
    %1537 = vmatprep.subr.mxu0 0.0
    %1538 = vmatpush1.msra.mxu0 0.0
    %1539 = vmatprep.subr.mxu0 0.0
    %1540 = vmatpush1.msra.mxu0 0.0
    %1541 = vmatprep.subr.mxu0 0.0
    %1542 = vmatpush1.msra.mxu0 0.0
    %1543 = vmatprep.subr.mxu0 0.0
    %1544 = vmatpush1.msra.mxu0 0.0
    %1545 = vmatprep.subr.mxu0 0.0
    %1546 = vmatpush1.msra.mxu0 0.0
    %1547 = vmatprep.subr.mxu0 0.0
    %1548 = vmatpush1.msra.mxu0 0.0
    %1549 = vmatprep.mubr.f32.mxu0 0.0
    %1550 = vmatmul.mubr.f32.gmra.mrb[0].mxu0 %v873
    %v1551 = vpop.f32.mrb[0].mxu0
    %v1552 = vadd.f32 0.0, %v1551
    %v1553 = vpop.f32.mrb[0].mxu0
    %1554 = vmatprep.mubr.f32.mxu0 0.0
    %1555 = vmatmul.mubr.f32.gmra.mrb[0].mxu0 %v875
    %v1556 = vpop.f32.mrb[0].mxu0
    %v1557 = vadd.f32 0.0, %v1556
    %v1558 = vpop.f32.mrb[0].mxu0
    %1559 = vmatprep.mubr.f32.mxu0 0.0
    %1560 = vmatmul.mubr.f32.gmra.mrb[0].mxu0 %v877
    %v1561 = vpop.f32.mrb[0].mxu0
    %v1562 = vadd.f32 0.0, %v1561
    %v1563 = vpop.f32.mrb[0].mxu0
    %1564 = vmatprep.mubr.f32.mxu0 0.0
    %1565 = vmatmul.mubr.f32.gmra.mrb[0].mxu0 %v879
    %v1566 = vpop.f32.mrb[0].mxu0
    %v1567 = vadd.f32 0.0, %v1566
    %v1568 = vpop.f32.mrb[0].mxu0
    %1569 = vdwg.mxu0
    %v1570 = vadd.f32 %v1476, %v1552
    %v1571 = vadd.f32 %v1477, %v1557
    %v1572 = vadd.f32 %v1478, %v1562
    %v1573 = vadd.f32 %v1479, %v1567
    %s1574 = scalar_lea.vmem [#allocation4], 64
    %v1575 = vld [vmem:[%s1574] sm:$0xff]
    %v1576 = vld [vmem:[%s1574 + $0x8] sm:$0xff]
    %v1577 = vld [vmem:[%s1574 + $0x10] sm:$0xff]
    %v1578 = vld [vmem:[%s1574 + $0x18] sm:$0xff]
    %1579 = vmatprep.subr.mxu0 0.0
    %1580 = vmatpush1.msra.mxu0 %v1575
    %1581 = vmatprep.subr.mxu0 0.0
    %1582 = vmatpush1.msra.mxu0 %v1576
    %1583 = vmatprep.subr.mxu0 0.0
    %1584 = vmatpush1.msra.mxu0 %v1577
    %1585 = vmatprep.subr.mxu0 0.0
    %1586 = vmatpush1.msra.mxu0 %v1578
    %1587 = vmatprep.subr.mxu0 0.0
    %1588 = vmatpush1.msra.mxu0 0.0
    %1589 = vmatprep.subr.mxu0 0.0
    %1590 = vmatpush1.msra.mxu0 0.0
    %1591 = vmatprep.subr.mxu0 0.0
    %1592 = vmatpush1.msra.mxu0 0.0
    %1593 = vmatprep.subr.mxu0 0.0
    %1594 = vmatpush1.msra.mxu0 0.0
    %1595 = vmatprep.subr.mxu0 0.0
    %1596 = vmatpush1.msra.mxu0 0.0
    %1597 = vmatprep.subr.mxu0 0.0
    %1598 = vmatpush1.msra.mxu0 0.0
    %1599 = vmatprep.subr.mxu0 0.0
    %1600 = vmatpush1.msra.mxu0 0.0
    %1601 = vmatprep.subr.mxu0 0.0
    %1602 = vmatpush1.msra.mxu0 0.0
    %1603 = vmatprep.subr.mxu0 0.0
    %1604 = vmatpush1.msra.mxu0 0.0
    %1605 = vmatprep.subr.mxu0 0.0
    %1606 = vmatpush1.msra.mxu0 0.0
    %1607 = vmatprep.subr.mxu0 0.0
    %1608 = vmatpush1.msra.mxu0 0.0
    %1609 = vmatprep.subr.mxu0 0.0
    %1610 = vmatpush1.msra.mxu0 0.0
    %1611 = vmatprep.subr.mxu0 0.0
    %1612 = vmatpush1.msra.mxu0 0.0
    %1613 = vmatprep.subr.mxu0 0.0
    %1614 = vmatpush1.msra.mxu0 0.0
    %1615 = vmatprep.subr.mxu0 0.0
    %1616 = vmatpush1.msra.mxu0 0.0
    %1617 = vmatprep.subr.mxu0 0.0
    %1618 = vmatpush1.msra.mxu0 0.0
    %1619 = vmatprep.subr.mxu0 0.0
    %1620 = vmatpush1.msra.mxu0 0.0
    %1621 = vmatprep.subr.mxu0 0.0
    %1622 = vmatpush1.msra.mxu0 0.0
    %1623 = vmatprep.subr.mxu0 0.0
    %1624 = vmatpush1.msra.mxu0 0.0
    %1625 = vmatprep.subr.mxu0 0.0
    %1626 = vmatpush1.msra.mxu0 0.0
    %1627 = vmatprep.subr.mxu0 0.0
    %1628 = vmatpush1.msra.mxu0 0.0
    %1629 = vmatprep.subr.mxu0 0.0
    %1630 = vmatpush1.msra.mxu0 0.0
    %1631 = vmatprep.subr.mxu0 0.0
    %1632 = vmatpush1.msra.mxu0 0.0
    %1633 = vmatprep.subr.mxu0 0.0
    %1634 = vmatpush1.msra.mxu0 0.0
    %1635 = vmatprep.subr.mxu0 0.0
    %1636 = vmatpush1.msra.mxu0 0.0
    %1637 = vmatprep.subr.mxu0 0.0
    %1638 = vmatpush1.msra.mxu0 0.0
    %1639 = vmatprep.subr.mxu0 0.0
    %1640 = vmatpush1.msra.mxu0 0.0
    %1641 = vmatprep.subr.mxu0 0.0
    %1642 = vmatpush1.msra.mxu0 0.0
    %1643 = vmatprep.mubr.f32.mxu0 0.0
    %1644 = vmatmul.mubr.f32.gmra.mrb[0].mxu0 %v978
    %v1645 = vpop.f32.mrb[0].mxu0
    %v1646 = vadd.f32 0.0, %v1645
    %v1647 = vpop.f32.mrb[0].mxu0
    %1648 = vmatprep.mubr.f32.mxu0 0.0
    %1649 = vmatmul.mubr.f32.gmra.mrb[0].mxu0 %v980
    %v1650 = vpop.f32.mrb[0].mxu0
    %v1651 = vadd.f32 0.0, %v1650
    %v1652 = vpop.f32.mrb[0].mxu0
    %1653 = vmatprep.mubr.f32.mxu0 0.0
    %1654 = vmatmul.mubr.f32.gmra.mrb[0].mxu0 %v982
    %v1655 = vpop.f32.mrb[0].mxu0
    %v1656 = vadd.f32 0.0, %v1655
    %v1657 = vpop.f32.mrb[0].mxu0
    %1658 = vmatprep.mubr.f32.mxu0 0.0
    %1659 = vmatmul.mubr.f32.gmra.mrb[0].mxu0 %v984
    %v1660 = vpop.f32.mrb[0].mxu0
    %v1661 = vadd.f32 0.0, %v1660
    %v1662 = vpop.f32.mrb[0].mxu0
    %1663 = vdwg.mxu0
    %v1664 = vadd.f32 %v1570, %v1646
    %v1665 = vadd.f32 %v1571, %v1651
    %v1666 = vadd.f32 %v1572, %v1656
    %v1667 = vadd.f32 %v1573, %v1661
    %v1668 = vxor.u32 %v1664, 2147483648
    %v1669 = vxor.u32 %v1665, 2147483648
    %v1670 = vxor.u32 %v1666, 2147483648
    %v1671 = vxor.u32 %v1667, 2147483648
    %v1672 = vmul.f32 %v1668, 1.442695
    %v1673 = vpow.pop %v1672
    %v1674 = vmul.f32 %v1669, 1.442695
    %v1675 = vpow.pop %v1674
    %v1676 = vmul.f32 %v1670, 1.442695
    %v1677 = vpow.pop %v1676
    %v1678 = vmul.f32 %v1671, 1.442695
    %v1679 = vpow.pop %v1678
    %v1680 = vadd.f32 %v1673, 1.0
    %v1681 = vadd.f32 %v1675, 1.0
    %v1682 = vadd.f32 %v1677, 1.0
    %v1683 = vadd.f32 %v1679, 1.0
    %v1684 = vrcp.pop %v1680
    %v1685 = vmul.f32 1.0, %v1684
    %v1686 = vrcp.pop %v1681
    %v1687 = vmul.f32 1.0, %v1686
    %v1688 = vrcp.pop %v1682
    %v1689 = vmul.f32 1.0, %v1688
    %v1690 = vrcp.pop %v1683
    %v1691 = vmul.f32 1.0, %v1690
    %v1692 = vmul.f32 %v1092, %v88
    %v1693 = vmul.f32 %v1094, %v89
    %v1694 = vmul.f32 %v1096, %v90
    %v1695 = vmul.f32 %v1098, %v91
    %1698 = vrot.lane.b32.xlu0 %v1694, 32
    %v1699 = vpop.permute.xlu0 %1698
    %1700 = vrot.lane.b32.xlu0 %v1695, 32
    %v1701 = vpop.permute.xlu0 %1700
    %v1704 = vsel %vm284, %v1692, %v1699
    %v1705 = vsel %vm284, %v1693, %v1701
    %1706 = vmatprep.subr.mxu0 0.0
    %1707 = vmatpush1.msra.mxu0 %v1704
    %1708 = vmatprep.subr.mxu0 0.0
    %1709 = vmatpush1.msra.mxu0 %v1705
    %1710 = vmatprep.subr.mxu0 0.0
    %1711 = vmatpush1.msra.mxu0 0.0
    %1712 = vmatprep.subr.mxu0 0.0
    %1713 = vmatpush1.msra.mxu0 0.0
    %1714 = vmatprep.subr.mxu0 0.0
    %1715 = vmatpush1.msra.mxu0 0.0
    %1716 = vmatprep.subr.mxu0 0.0
    %1717 = vmatpush1.msra.mxu0 0.0
    %1718 = vmatprep.subr.mxu0 0.0
    %1719 = vmatpush1.msra.mxu0 0.0
    %1720 = vmatprep.subr.mxu0 0.0
    %1721 = vmatpush1.msra.mxu0 0.0
    %1722 = vmatprep.subr.mxu0 0.0
    %1723 = vmatpush1.msra.mxu0 0.0
    %1724 = vmatprep.subr.mxu0 0.0
    %1725 = vmatpush1.msra.mxu0 0.0
    %1726 = vmatprep.subr.mxu0 0.0
    %1727 = vmatpush1.msra.mxu0 0.0
    %1728 = vmatprep.subr.mxu0 0.0
    %1729 = vmatpush1.msra.mxu0 0.0
    %1730 = vmatprep.subr.mxu0 0.0
    %1731 = vmatpush1.msra.mxu0 0.0
    %1732 = vmatprep.subr.mxu0 0.0
    %1733 = vmatpush1.msra.mxu0 0.0
    %1734 = vmatprep.subr.mxu0 0.0
    %1735 = vmatpush1.msra.mxu0 0.0
    %1736 = vmatprep.subr.mxu0 0.0
    %1737 = vmatpush1.msra.mxu0 0.0
    %1738 = vmatprep.subr.mxu0 0.0
    %1739 = vmatpush1.msra.mxu0 0.0
    %1740 = vmatprep.subr.mxu0 0.0
    %1741 = vmatpush1.msra.mxu0 0.0
    %1742 = vmatprep.subr.mxu0 0.0
    %1743 = vmatpush1.msra.mxu0 0.0
    %1744 = vmatprep.subr.mxu0 0.0
    %1745 = vmatpush1.msra.mxu0 0.0
    %1746 = vmatprep.subr.mxu0 0.0
    %1747 = vmatpush1.msra.mxu0 0.0
    %1748 = vmatprep.subr.mxu0 0.0
    %1749 = vmatpush1.msra.mxu0 0.0
    %1750 = vmatprep.subr.mxu0 0.0
    %1751 = vmatpush1.msra.mxu0 0.0
    %1752 = vmatprep.subr.mxu0 0.0
    %1753 = vmatpush1.msra.mxu0 0.0
    %1754 = vmatprep.subr.mxu0 0.0
    %1755 = vmatpush1.msra.mxu0 0.0
    %1756 = vmatprep.subr.mxu0 0.0
    %1757 = vmatpush1.msra.mxu0 0.0
    %1758 = vmatprep.subr.mxu0 0.0
    %1759 = vmatpush1.msra.mxu0 0.0
    %1760 = vmatprep.subr.mxu0 0.0
    %1761 = vmatpush1.msra.mxu0 0.0
    %1762 = vmatprep.subr.mxu0 0.0
    %1763 = vmatpush1.msra.mxu0 0.0
    %1764 = vmatprep.subr.mxu0 0.0
    %1765 = vmatpush1.msra.mxu0 0.0
    %1766 = vmatprep.subr.mxu0 0.0
    %1767 = vmatpush1.msra.mxu0 0.0
    %1768 = vmatprep.subr.mxu0 0.0
    %1769 = vmatpush1.msra.mxu0 0.0
    %1770 = vmatprep.mubr.f32.mxu0 0.0
    %1771 = vmatmul.mubr.f32.gmra.mrb[0].mxu0 %v105
    %v1772 = vpop.f32.mrb[0].mxu0
    %v1773 = vadd.f32 0.0, %v1772
    %v1774 = vpop.f32.mrb[0].mxu0
    %1775 = vmatprep.mubr.f32.mxu0 0.0
    %1776 = vmatmul.mubr.f32.gmra.mrb[0].mxu0 %v108
    %v1777 = vpop.f32.mrb[0].mxu0
    %v1778 = vadd.f32 0.0, %v1777
    %v1779 = vpop.f32.mrb[0].mxu0
    %1780 = vdwg.mxu0
    %1783 = vrot.lane.b32.xlu0 %v1773, 96
    %v1784 = vpop.permute.xlu0 %1783
    %1785 = vrot.lane.b32.xlu0 %v1778, 96
    %v1786 = vpop.permute.xlu0 %1785
    %1787 = vmatprep.subr.mxu0 0.0
    %1788 = vmatpush1.msra.mxu0 %v1773
    %1789 = vmatprep.subr.mxu0 0.0
    %1790 = vmatpush1.msra.mxu0 %v1778
    %1791 = vmatprep.subr.mxu0 0.0
    %1792 = vmatpush1.msra.mxu0 0.0
    %1793 = vmatprep.subr.mxu0 0.0
    %1794 = vmatpush1.msra.mxu0 0.0
    %1795 = vmatprep.subr.mxu0 0.0
    %1796 = vmatpush1.msra.mxu0 0.0
    %1797 = vmatprep.subr.mxu0 0.0
    %1798 = vmatpush1.msra.mxu0 0.0
    %1799 = vmatprep.subr.mxu0 0.0
    %1800 = vmatpush1.msra.mxu0 0.0
    %1801 = vmatprep.subr.mxu0 0.0
    %1802 = vmatpush1.msra.mxu0 0.0
    %1803 = vmatprep.subr.mxu0 0.0
    %1804 = vmatpush1.msra.mxu0 0.0
    %1805 = vmatprep.subr.mxu0 0.0
    %1806 = vmatpush1.msra.mxu0 0.0
    %1807 = vmatprep.subr.mxu0 0.0
    %1808 = vmatpush1.msra.mxu0 0.0
    %1809 = vmatprep.subr.mxu0 0.0
    %1810 = vmatpush1.msra.mxu0 0.0
    %1811 = vmatprep.subr.mxu0 0.0
    %1812 = vmatpush1.msra.mxu0 0.0
    %1813 = vmatprep.subr.mxu0 0.0
    %1814 = vmatpush1.msra.mxu0 0.0
    %1815 = vmatprep.subr.mxu0 0.0
    %1816 = vmatpush1.msra.mxu0 0.0
    %1817 = vmatprep.subr.mxu0 0.0
    %1818 = vmatpush1.msra.mxu0 0.0
    %1819 = vmatprep.subr.mxu0 0.0
    %1820 = vmatpush1.msra.mxu0 0.0
    %1821 = vmatprep.subr.mxu0 0.0
    %1822 = vmatpush1.msra.mxu0 0.0
    %1823 = vmatprep.subr.mxu0 0.0
    %1824 = vmatpush1.msra.mxu0 0.0
    %1825 = vmatprep.subr.mxu0 0.0
    %1826 = vmatpush1.msra.mxu0 0.0
    %1827 = vmatprep.subr.mxu0 0.0
    %1828 = vmatpush1.msra.mxu0 0.0
    %1829 = vmatprep.subr.mxu0 0.0
    %1830 = vmatpush1.msra.mxu0 0.0
    %1831 = vmatprep.subr.mxu0 0.0
    %1832 = vmatpush1.msra.mxu0 0.0
    %1833 = vmatprep.subr.mxu0 0.0
    %1834 = vmatpush1.msra.mxu0 0.0
    %1835 = vmatprep.subr.mxu0 0.0
    %1836 = vmatpush1.msra.mxu0 0.0
    %1837 = vmatprep.subr.mxu0 0.0
    %1838 = vmatpush1.msra.mxu0 0.0
    %1839 = vmatprep.subr.mxu0 0.0
    %1840 = vmatpush1.msra.mxu0 0.0
    %1841 = vmatprep.subr.mxu0 0.0
    %1842 = vmatpush1.msra.mxu0 0.0
    %1843 = vmatprep.subr.mxu0 0.0
    %1844 = vmatpush1.msra.mxu0 0.0
    %1845 = vmatprep.subr.mxu0 0.0
    %1846 = vmatpush1.msra.mxu0 0.0
    %1847 = vmatprep.subr.mxu0 0.0
    %1848 = vmatpush1.msra.mxu0 0.0
    %1849 = vmatprep.subr.mxu0 0.0
    %1850 = vmatpush1.msra.mxu0 0.0
    %1851 = vmatprep.mubr.f32.mxu0 0.0
    %1852 = vmatmul.mubr.f32.gmra.mrb[0].mxu0 %v105
    %v1853 = vpop.f32.mrb[0].mxu0
    %v1854 = vadd.f32 0.0, %v1853
    %v1855 = vpop.f32.mrb[0].mxu0
    %1856 = vmatprep.mubr.f32.mxu0 0.0
    %1857 = vmatmul.mubr.f32.gmra.mrb[0].mxu0 %v108
    %v1858 = vpop.f32.mrb[0].mxu0
    %v1859 = vadd.f32 0.0, %v1858
    %v1860 = vpop.f32.mrb[0].mxu0
    %1861 = vdwg.mxu0
    %v1862 = vmul.f32 %v1854, 2.0
    %v1863 = vmul.f32 %v1859, 2.0
    %v1864 = vsub.f32 %v1862, %v1704
    %v1865 = vsub.f32 %v1863, %v1705
    %1868 = vrot.lane.b32.xlu0 %v1864, 96
    %v1869 = vpop.permute.xlu0 %1868
    %1870 = vrot.lane.b32.xlu0 %v1865, 96
    %v1871 = vpop.permute.xlu0 %1870
    %v1872 = vld [vmem:[%s11] sm:$0x1]
    %v1873 = vld [vmem:[%s7] sm:$0xf]
    %v1875 = vsel %vm465, %v1873, 0
    %1877 = vmatprep.subr.mxu0 0.0
    %1878 = vmatpush1.msra.mxu0 %v1875
    %1879 = vmatprep.subr.mxu0 0.0
    %1880 = vmatpush1.msra.mxu0 0.0
    %1881 = vmatprep.subr.mxu0 0.0
    %1882 = vmatpush1.msra.mxu0 0.0
    %1883 = vmatprep.subr.mxu0 0.0
    %1884 = vmatpush1.msra.mxu0 0.0
    %1885 = vmatprep.subr.mxu0 0.0
    %1886 = vmatpush1.msra.mxu0 0.0
    %1887 = vmatprep.subr.mxu0 0.0
    %1888 = vmatpush1.msra.mxu0 0.0
    %1889 = vmatprep.subr.mxu0 0.0
    %1890 = vmatpush1.msra.mxu0 0.0
    %1891 = vmatprep.subr.mxu0 0.0
    %1892 = vmatpush1.msra.mxu0 0.0
    %1893 = vmatprep.subr.mxu0 0.0
    %1894 = vmatpush1.msra.mxu0 0.0
    %1895 = vmatprep.subr.mxu0 0.0
    %1896 = vmatpush1.msra.mxu0 0.0
    %1897 = vmatprep.subr.mxu0 0.0
    %1898 = vmatpush1.msra.mxu0 0.0
    %1899 = vmatprep.subr.mxu0 0.0
    %1900 = vmatpush1.msra.mxu0 0.0
    %1901 = vmatprep.subr.mxu0 0.0
    %1902 = vmatpush1.msra.mxu0 0.0
    %1903 = vmatprep.subr.mxu0 0.0
    %1904 = vmatpush1.msra.mxu0 0.0
    %1905 = vmatprep.subr.mxu0 0.0
    %1906 = vmatpush1.msra.mxu0 0.0
    %1907 = vmatprep.subr.mxu0 0.0
    %1908 = vmatpush1.msra.mxu0 0.0
    %1909 = vmatprep.subr.mxu0 0.0
    %1910 = vmatpush1.msra.mxu0 0.0
    %1911 = vmatprep.subr.mxu0 0.0
    %1912 = vmatpush1.msra.mxu0 0.0
    %1913 = vmatprep.subr.mxu0 0.0
    %1914 = vmatpush1.msra.mxu0 0.0
    %1915 = vmatprep.subr.mxu0 0.0
    %1916 = vmatpush1.msra.mxu0 0.0
    %1917 = vmatprep.subr.mxu0 0.0
    %1918 = vmatpush1.msra.mxu0 0.0
    %1919 = vmatprep.subr.mxu0 0.0
    %1920 = vmatpush1.msra.mxu0 0.0
    %1921 = vmatprep.subr.mxu0 0.0
    %1922 = vmatpush1.msra.mxu0 0.0
    %1923 = vmatprep.subr.mxu0 0.0
    %1924 = vmatpush1.msra.mxu0 0.0
    %1925 = vmatprep.subr.mxu0 0.0
    %1926 = vmatpush1.msra.mxu0 0.0
    %1927 = vmatprep.subr.mxu0 0.0
    %1928 = vmatpush1.msra.mxu0 0.0
    %1929 = vmatprep.subr.mxu0 0.0
    %1930 = vmatpush1.msra.mxu0 0.0
    %1931 = vmatprep.subr.mxu0 0.0
    %1932 = vmatpush1.msra.mxu0 0.0
    %1933 = vmatprep.subr.mxu0 0.0
    %1934 = vmatpush1.msra.mxu0 0.0
    %1935 = vmatprep.subr.mxu0 0.0
    %1936 = vmatpush1.msra.mxu0 0.0
    %1937 = vmatprep.subr.mxu0 0.0
    %1938 = vmatpush1.msra.mxu0 0.0
    %1939 = vmatprep.subr.mxu0 0.0
    %1940 = vmatpush1.msra.mxu0 0.0
    %1941 = vmatprep.mubr.f32.mxu0 0.0
    %1942 = vmatmul.mubr.f32.gmra.mrb[0].mxu0 %v456
    %v1943 = vpop.f32.mrb[0].mxu0
    %v1944 = vadd.f32 0.0, %v1943
    %v1945 = vpop.f32.mrb[0].mxu0
    %1946 = vmatprep.mubr.f32.mxu0 0.0
    %1947 = vmatmul.mubr.f32.gmra.mrb[0].mxu0 %v459
    %v1948 = vpop.f32.mrb[0].mxu0
    %v1949 = vadd.f32 0.0, %v1948
    %v1950 = vpop.f32.mrb[0].mxu0
    %1951 = vmatprep.mubr.f32.mxu0 0.0
    %1952 = vmatmul.mubr.f32.gmra.mrb[0].mxu0 %v461
    %v1953 = vpop.f32.mrb[0].mxu0
    %v1954 = vadd.f32 0.0, %v1953
    %v1955 = vpop.f32.mrb[0].mxu0
    %1956 = vmatprep.mubr.f32.mxu0 0.0
    %1957 = vmatmul.mubr.f32.gmra.mrb[0].mxu0 %v463
    %v1958 = vpop.f32.mrb[0].mxu0
    %v1959 = vadd.f32 0.0, %v1958
    %v1960 = vpop.f32.mrb[0].mxu0
    %1961 = vdwg.mxu0
    %v1963 = vlaneseq
    %v1964 = vshrl.u32 %v1963, 7
    %v1965 = vsub.s32 0, %v1964
    %v1966 = vrot.slane %v1872, %v1965
    %v1968 = vadd.f32 %v1966, %v1944
    %v1969 = vadd.f32 %v1966, %v1949
    %v1970 = vadd.f32 %v1966, %v1954
    %v1971 = vadd.f32 %v1966, %v1959
    %v1972 = vld [vmem:[#allocation6] sm:$0xff]
    %v1973 = vld [vmem:[#allocation6 + $0x8] sm:$0xff]
    %v1974 = vld [vmem:[#allocation6 + $0x10] sm:$0xff]
    %v1975 = vld [vmem:[#allocation6 + $0x18] sm:$0xff]
    %v1977 = vsel %vm284, %v1692, 0
    %v1980 = vsel %vm284, %v1693, 0
    %v1982 = vsel %vm284, %v1694, 0
    %v1984 = vsel %vm284, %v1695, 0
    %1986 = vmatprep.subr.mxu0 0.0
    %1987 = vmatpush1.msra.mxu0 %v1972
    %1988 = vmatprep.subr.mxu0 0.0
    %1989 = vmatpush1.msra.mxu0 %v1973
    %1990 = vmatprep.subr.mxu0 0.0
    %1991 = vmatpush1.msra.mxu0 %v1974
    %1992 = vmatprep.subr.mxu0 0.0
    %1993 = vmatpush1.msra.mxu0 %v1975
    %1994 = vmatprep.subr.mxu0 0.0
    %1995 = vmatpush1.msra.mxu0 0.0
    %1996 = vmatprep.subr.mxu0 0.0
    %1997 = vmatpush1.msra.mxu0 0.0
    %1998 = vmatprep.subr.mxu0 0.0
    %1999 = vmatpush1.msra.mxu0 0.0
    %2000 = vmatprep.subr.mxu0 0.0
    %2001 = vmatpush1.msra.mxu0 0.0
    %2002 = vmatprep.subr.mxu0 0.0
    %2003 = vmatpush1.msra.mxu0 0.0
    %2004 = vmatprep.subr.mxu0 0.0
    %2005 = vmatpush1.msra.mxu0 0.0
    %2006 = vmatprep.subr.mxu0 0.0
    %2007 = vmatpush1.msra.mxu0 0.0
    %2008 = vmatprep.subr.mxu0 0.0
    %2009 = vmatpush1.msra.mxu0 0.0
    %2010 = vmatprep.subr.mxu0 0.0
    %2011 = vmatpush1.msra.mxu0 0.0
    %2012 = vmatprep.subr.mxu0 0.0
    %2013 = vmatpush1.msra.mxu0 0.0
    %2014 = vmatprep.subr.mxu0 0.0
    %2015 = vmatpush1.msra.mxu0 0.0
    %2016 = vmatprep.subr.mxu0 0.0
    %2017 = vmatpush1.msra.mxu0 0.0
    %2018 = vmatprep.subr.mxu0 0.0
    %2019 = vmatpush1.msra.mxu0 0.0
    %2020 = vmatprep.subr.mxu0 0.0
    %2021 = vmatpush1.msra.mxu0 0.0
    %2022 = vmatprep.subr.mxu0 0.0
    %2023 = vmatpush1.msra.mxu0 0.0
    %2024 = vmatprep.subr.mxu0 0.0
    %2025 = vmatpush1.msra.mxu0 0.0
    %2026 = vmatprep.subr.mxu0 0.0
    %2027 = vmatpush1.msra.mxu0 0.0
    %2028 = vmatprep.subr.mxu0 0.0
    %2029 = vmatpush1.msra.mxu0 0.0
    %2030 = vmatprep.subr.mxu0 0.0
    %2031 = vmatpush1.msra.mxu0 0.0
    %2032 = vmatprep.subr.mxu0 0.0
    %2033 = vmatpush1.msra.mxu0 0.0
    %2034 = vmatprep.subr.mxu0 0.0
    %2035 = vmatpush1.msra.mxu0 0.0
    %2036 = vmatprep.subr.mxu0 0.0
    %2037 = vmatpush1.msra.mxu0 0.0
    %2038 = vmatprep.subr.mxu0 0.0
    %2039 = vmatpush1.msra.mxu0 0.0
    %2040 = vmatprep.subr.mxu0 0.0
    %2041 = vmatpush1.msra.mxu0 0.0
    %2042 = vmatprep.subr.mxu0 0.0
    %2043 = vmatpush1.msra.mxu0 0.0
    %2044 = vmatprep.subr.mxu0 0.0
    %2045 = vmatpush1.msra.mxu0 0.0
    %2046 = vmatprep.subr.mxu0 0.0
    %2047 = vmatpush1.msra.mxu0 0.0
    %2048 = vmatprep.subr.mxu0 0.0
    %2049 = vmatpush1.msra.mxu0 0.0
    %2050 = vmatprep.mubr.f32.mxu0 0.0
    %2051 = vmatmul.mubr.f32.gmra.mrb[0].mxu0 %v1977
    %v2052 = vpop.f32.mrb[0].mxu0
    %v2053 = vadd.f32 0.0, %v2052
    %v2054 = vpop.f32.mrb[0].mxu0
    %2055 = vmatprep.mubr.f32.mxu0 0.0
    %2056 = vmatmul.mubr.f32.gmra.mrb[0].mxu0 %v1980
    %v2057 = vpop.f32.mrb[0].mxu0
    %v2058 = vadd.f32 0.0, %v2057
    %v2059 = vpop.f32.mrb[0].mxu0
    %2060 = vmatprep.mubr.f32.mxu0 0.0
    %2061 = vmatmul.mubr.f32.gmra.mrb[0].mxu0 %v1982
    %v2062 = vpop.f32.mrb[0].mxu0
    %v2063 = vadd.f32 0.0, %v2062
    %v2064 = vpop.f32.mrb[0].mxu0
    %2065 = vmatprep.mubr.f32.mxu0 0.0
    %2066 = vmatmul.mubr.f32.gmra.mrb[0].mxu0 %v1984
    %v2067 = vpop.f32.mrb[0].mxu0
    %v2068 = vadd.f32 0.0, %v2067
    %v2069 = vpop.f32.mrb[0].mxu0
    %2070 = vdwg.mxu0
    %v2071 = vadd.f32 %v1968, %v2053
    %v2072 = vadd.f32 %v1969, %v2058
    %v2073 = vadd.f32 %v1970, %v2063
    %v2074 = vadd.f32 %v1971, %v2068
    %s2075 = scalar_lea.vmem %s7, 4
    %v2076 = vld [vmem:[%s2075] sm:$0xf]
    %v2078 = vsel %vm465, %v2076, 0
    %2080 = vmatprep.subr.mxu0 0.0
    %2081 = vmatpush1.msra.mxu0 %v2078
    %2082 = vmatprep.subr.mxu0 0.0
    %2083 = vmatpush1.msra.mxu0 0.0
    %2084 = vmatprep.subr.mxu0 0.0
    %2085 = vmatpush1.msra.mxu0 0.0
    %2086 = vmatprep.subr.mxu0 0.0
    %2087 = vmatpush1.msra.mxu0 0.0
    %2088 = vmatprep.subr.mxu0 0.0
    %2089 = vmatpush1.msra.mxu0 0.0
    %2090 = vmatprep.subr.mxu0 0.0
    %2091 = vmatpush1.msra.mxu0 0.0
    %2092 = vmatprep.subr.mxu0 0.0
    %2093 = vmatpush1.msra.mxu0 0.0
    %2094 = vmatprep.subr.mxu0 0.0
    %2095 = vmatpush1.msra.mxu0 0.0
    %2096 = vmatprep.subr.mxu0 0.0
    %2097 = vmatpush1.msra.mxu0 0.0
    %2098 = vmatprep.subr.mxu0 0.0
    %2099 = vmatpush1.msra.mxu0 0.0
    %2100 = vmatprep.subr.mxu0 0.0
    %2101 = vmatpush1.msra.mxu0 0.0
    %2102 = vmatprep.subr.mxu0 0.0
    %2103 = vmatpush1.msra.mxu0 0.0
    %2104 = vmatprep.subr.mxu0 0.0
    %2105 = vmatpush1.msra.mxu0 0.0
    %2106 = vmatprep.subr.mxu0 0.0
    %2107 = vmatpush1.msra.mxu0 0.0
    %2108 = vmatprep.subr.mxu0 0.0
    %2109 = vmatpush1.msra.mxu0 0.0
    %2110 = vmatprep.subr.mxu0 0.0
    %2111 = vmatpush1.msra.mxu0 0.0
    %2112 = vmatprep.subr.mxu0 0.0
    %2113 = vmatpush1.msra.mxu0 0.0
    %2114 = vmatprep.subr.mxu0 0.0
    %2115 = vmatpush1.msra.mxu0 0.0
    %2116 = vmatprep.subr.mxu0 0.0
    %2117 = vmatpush1.msra.mxu0 0.0
    %2118 = vmatprep.subr.mxu0 0.0
    %2119 = vmatpush1.msra.mxu0 0.0
    %2120 = vmatprep.subr.mxu0 0.0
    %2121 = vmatpush1.msra.mxu0 0.0
    %2122 = vmatprep.subr.mxu0 0.0
    %2123 = vmatpush1.msra.mxu0 0.0
    %2124 = vmatprep.subr.mxu0 0.0
    %2125 = vmatpush1.msra.mxu0 0.0
    %2126 = vmatprep.subr.mxu0 0.0
    %2127 = vmatpush1.msra.mxu0 0.0
    %2128 = vmatprep.subr.mxu0 0.0
    %2129 = vmatpush1.msra.mxu0 0.0
    %2130 = vmatprep.subr.mxu0 0.0
    %2131 = vmatpush1.msra.mxu0 0.0
    %2132 = vmatprep.subr.mxu0 0.0
    %2133 = vmatpush1.msra.mxu0 0.0
    %2134 = vmatprep.subr.mxu0 0.0
    %2135 = vmatpush1.msra.mxu0 0.0
    %2136 = vmatprep.subr.mxu0 0.0
    %2137 = vmatpush1.msra.mxu0 0.0
    %2138 = vmatprep.subr.mxu0 0.0
    %2139 = vmatpush1.msra.mxu0 0.0
    %2140 = vmatprep.subr.mxu0 0.0
    %2141 = vmatpush1.msra.mxu0 0.0
    %2142 = vmatprep.subr.mxu0 0.0
    %2143 = vmatpush1.msra.mxu0 0.0
    %2144 = vmatprep.mubr.f32.mxu0 0.0
    %2145 = vmatmul.mubr.f32.gmra.mrb[0].mxu0 %v669
    %v2146 = vpop.f32.mrb[0].mxu0
    %v2147 = vadd.f32 0.0, %v2146
    %v2148 = vpop.f32.mrb[0].mxu0
    %2149 = vmatprep.mubr.f32.mxu0 0.0
    %2150 = vmatmul.mubr.f32.gmra.mrb[0].mxu0 %v671
    %v2151 = vpop.f32.mrb[0].mxu0
    %v2152 = vadd.f32 0.0, %v2151
    %v2153 = vpop.f32.mrb[0].mxu0
    %2154 = vmatprep.mubr.f32.mxu0 0.0
    %2155 = vmatmul.mubr.f32.gmra.mrb[0].mxu0 %v673
    %v2156 = vpop.f32.mrb[0].mxu0
    %v2157 = vadd.f32 0.0, %v2156
    %v2158 = vpop.f32.mrb[0].mxu0
    %2159 = vmatprep.mubr.f32.mxu0 0.0
    %2160 = vmatmul.mubr.f32.gmra.mrb[0].mxu0 %v675
    %v2161 = vpop.f32.mrb[0].mxu0
    %v2162 = vadd.f32 0.0, %v2161
    %v2163 = vpop.f32.mrb[0].mxu0
    %2164 = vdwg.mxu0
    %v2165 = vadd.f32 %v2071, %v2147
    %v2166 = vadd.f32 %v2072, %v2152
    %v2167 = vadd.f32 %v2073, %v2157
    %v2168 = vadd.f32 %v2074, %v2162
    %s2169 = scalar_lea.vmem [#allocation6], 32
    %v2170 = vld [vmem:[%s2169] sm:$0xff]
    %v2171 = vld [vmem:[%s2169 + $0x8] sm:$0xff]
    %v2172 = vld [vmem:[%s2169 + $0x10] sm:$0xff]
    %v2173 = vld [vmem:[%s2169 + $0x18] sm:$0xff]
    %v2174 = vsel %vm284, %v1773, 0
    %v2176 = vsel %vm284, %v1778, 0
    %v2178 = vsel %vm284, %v1784, 0
    %v2180 = vsel %vm284, %v1786, 0
    %2182 = vmatprep.subr.mxu0 0.0
    %2183 = vmatpush1.msra.mxu0 %v2170
    %2184 = vmatprep.subr.mxu0 0.0
    %2185 = vmatpush1.msra.mxu0 %v2171
    %2186 = vmatprep.subr.mxu0 0.0
    %2187 = vmatpush1.msra.mxu0 %v2172
    %2188 = vmatprep.subr.mxu0 0.0
    %2189 = vmatpush1.msra.mxu0 %v2173
    %2190 = vmatprep.subr.mxu0 0.0
    %2191 = vmatpush1.msra.mxu0 0.0
    %2192 = vmatprep.subr.mxu0 0.0
    %2193 = vmatpush1.msra.mxu0 0.0
    %2194 = vmatprep.subr.mxu0 0.0
    %2195 = vmatpush1.msra.mxu0 0.0
    %2196 = vmatprep.subr.mxu0 0.0
    %2197 = vmatpush1.msra.mxu0 0.0
    %2198 = vmatprep.subr.mxu0 0.0
    %2199 = vmatpush1.msra.mxu0 0.0
    %2200 = vmatprep.subr.mxu0 0.0
    %2201 = vmatpush1.msra.mxu0 0.0
    %2202 = vmatprep.subr.mxu0 0.0
    %2203 = vmatpush1.msra.mxu0 0.0
    %2204 = vmatprep.subr.mxu0 0.0
    %2205 = vmatpush1.msra.mxu0 0.0
    %2206 = vmatprep.subr.mxu0 0.0
    %2207 = vmatpush1.msra.mxu0 0.0
    %2208 = vmatprep.subr.mxu0 0.0
    %2209 = vmatpush1.msra.mxu0 0.0
    %2210 = vmatprep.subr.mxu0 0.0
    %2211 = vmatpush1.msra.mxu0 0.0
    %2212 = vmatprep.subr.mxu0 0.0
    %2213 = vmatpush1.msra.mxu0 0.0
    %2214 = vmatprep.subr.mxu0 0.0
    %2215 = vmatpush1.msra.mxu0 0.0
    %2216 = vmatprep.subr.mxu0 0.0
    %2217 = vmatpush1.msra.mxu0 0.0
    %2218 = vmatprep.subr.mxu0 0.0
    %2219 = vmatpush1.msra.mxu0 0.0
    %2220 = vmatprep.subr.mxu0 0.0
    %2221 = vmatpush1.msra.mxu0 0.0
    %2222 = vmatprep.subr.mxu0 0.0
    %2223 = vmatpush1.msra.mxu0 0.0
    %2224 = vmatprep.subr.mxu0 0.0
    %2225 = vmatpush1.msra.mxu0 0.0
    %2226 = vmatprep.subr.mxu0 0.0
    %2227 = vmatpush1.msra.mxu0 0.0
    %2228 = vmatprep.subr.mxu0 0.0
    %2229 = vmatpush1.msra.mxu0 0.0
    %2230 = vmatprep.subr.mxu0 0.0
    %2231 = vmatpush1.msra.mxu0 0.0
    %2232 = vmatprep.subr.mxu0 0.0
    %2233 = vmatpush1.msra.mxu0 0.0
    %2234 = vmatprep.subr.mxu0 0.0
    %2235 = vmatpush1.msra.mxu0 0.0
    %2236 = vmatprep.subr.mxu0 0.0
    %2237 = vmatpush1.msra.mxu0 0.0
    %2238 = vmatprep.subr.mxu0 0.0
    %2239 = vmatpush1.msra.mxu0 0.0
    %2240 = vmatprep.subr.mxu0 0.0
    %2241 = vmatpush1.msra.mxu0 0.0
    %2242 = vmatprep.subr.mxu0 0.0
    %2243 = vmatpush1.msra.mxu0 0.0
    %2244 = vmatprep.subr.mxu0 0.0
    %2245 = vmatpush1.msra.mxu0 0.0
    %2246 = vmatprep.mubr.f32.mxu0 0.0
    %2247 = vmatmul.mubr.f32.gmra.mrb[0].mxu0 %v2174
    %v2248 = vpop.f32.mrb[0].mxu0
    %v2249 = vadd.f32 0.0, %v2248
    %v2250 = vpop.f32.mrb[0].mxu0
    %2251 = vmatprep.mubr.f32.mxu0 0.0
    %2252 = vmatmul.mubr.f32.gmra.mrb[0].mxu0 %v2176
    %v2253 = vpop.f32.mrb[0].mxu0
    %v2254 = vadd.f32 0.0, %v2253
    %v2255 = vpop.f32.mrb[0].mxu0
    %2256 = vmatprep.mubr.f32.mxu0 0.0
    %2257 = vmatmul.mubr.f32.gmra.mrb[0].mxu0 %v2178
    %v2258 = vpop.f32.mrb[0].mxu0
    %v2259 = vadd.f32 0.0, %v2258
    %v2260 = vpop.f32.mrb[0].mxu0
    %2261 = vmatprep.mubr.f32.mxu0 0.0
    %2262 = vmatmul.mubr.f32.gmra.mrb[0].mxu0 %v2180
    %v2263 = vpop.f32.mrb[0].mxu0
    %v2264 = vadd.f32 0.0, %v2263
    %v2265 = vpop.f32.mrb[0].mxu0
    %2266 = vdwg.mxu0
    %v2267 = vadd.f32 %v2165, %v2249
    %v2268 = vadd.f32 %v2166, %v2254
    %v2269 = vadd.f32 %v2167, %v2259
    %v2270 = vadd.f32 %v2168, %v2264
    %s2271 = scalar_lea.vmem %s7, 8
    %v2272 = vld [vmem:[%s2271] sm:$0xf]
    %v2274 = vsel %vm465, %v2272, 0
    %2276 = vmatprep.subr.mxu0 0.0
    %2277 = vmatpush1.msra.mxu0 %v2274
    %2278 = vmatprep.subr.mxu0 0.0
    %2279 = vmatpush1.msra.mxu0 0.0
    %2280 = vmatprep.subr.mxu0 0.0
    %2281 = vmatpush1.msra.mxu0 0.0
    %2282 = vmatprep.subr.mxu0 0.0
    %2283 = vmatpush1.msra.mxu0 0.0
    %2284 = vmatprep.subr.mxu0 0.0
    %2285 = vmatpush1.msra.mxu0 0.0
    %2286 = vmatprep.subr.mxu0 0.0
    %2287 = vmatpush1.msra.mxu0 0.0
    %2288 = vmatprep.subr.mxu0 0.0
    %2289 = vmatpush1.msra.mxu0 0.0
    %2290 = vmatprep.subr.mxu0 0.0
    %2291 = vmatpush1.msra.mxu0 0.0
    %2292 = vmatprep.subr.mxu0 0.0
    %2293 = vmatpush1.msra.mxu0 0.0
    %2294 = vmatprep.subr.mxu0 0.0
    %2295 = vmatpush1.msra.mxu0 0.0
    %2296 = vmatprep.subr.mxu0 0.0
    %2297 = vmatpush1.msra.mxu0 0.0
    %2298 = vmatprep.subr.mxu0 0.0
    %2299 = vmatpush1.msra.mxu0 0.0
    %2300 = vmatprep.subr.mxu0 0.0
    %2301 = vmatpush1.msra.mxu0 0.0
    %2302 = vmatprep.subr.mxu0 0.0
    %2303 = vmatpush1.msra.mxu0 0.0
    %2304 = vmatprep.subr.mxu0 0.0
    %2305 = vmatpush1.msra.mxu0 0.0
    %2306 = vmatprep.subr.mxu0 0.0
    %2307 = vmatpush1.msra.mxu0 0.0
    %2308 = vmatprep.subr.mxu0 0.0
    %2309 = vmatpush1.msra.mxu0 0.0
    %2310 = vmatprep.subr.mxu0 0.0
    %2311 = vmatpush1.msra.mxu0 0.0
    %2312 = vmatprep.subr.mxu0 0.0
    %2313 = vmatpush1.msra.mxu0 0.0
    %2314 = vmatprep.subr.mxu0 0.0
    %2315 = vmatpush1.msra.mxu0 0.0
    %2316 = vmatprep.subr.mxu0 0.0
    %2317 = vmatpush1.msra.mxu0 0.0
    %2318 = vmatprep.subr.mxu0 0.0
    %2319 = vmatpush1.msra.mxu0 0.0
    %2320 = vmatprep.subr.mxu0 0.0
    %2321 = vmatpush1.msra.mxu0 0.0
    %2322 = vmatprep.subr.mxu0 0.0
    %2323 = vmatpush1.msra.mxu0 0.0
    %2324 = vmatprep.subr.mxu0 0.0
    %2325 = vmatpush1.msra.mxu0 0.0
    %2326 = vmatprep.subr.mxu0 0.0
    %2327 = vmatpush1.msra.mxu0 0.0
    %2328 = vmatprep.subr.mxu0 0.0
    %2329 = vmatpush1.msra.mxu0 0.0
    %2330 = vmatprep.subr.mxu0 0.0
    %2331 = vmatpush1.msra.mxu0 0.0
    %2332 = vmatprep.subr.mxu0 0.0
    %2333 = vmatpush1.msra.mxu0 0.0
    %2334 = vmatprep.subr.mxu0 0.0
    %2335 = vmatpush1.msra.mxu0 0.0
    %2336 = vmatprep.subr.mxu0 0.0
    %2337 = vmatpush1.msra.mxu0 0.0
    %2338 = vmatprep.subr.mxu0 0.0
    %2339 = vmatpush1.msra.mxu0 0.0
    %2340 = vmatprep.mubr.f32.mxu0 0.0
    %2341 = vmatmul.mubr.f32.gmra.mrb[0].mxu0 %v873
    %v2342 = vpop.f32.mrb[0].mxu0
    %v2343 = vadd.f32 0.0, %v2342
    %v2344 = vpop.f32.mrb[0].mxu0
    %2345 = vmatprep.mubr.f32.mxu0 0.0
    %2346 = vmatmul.mubr.f32.gmra.mrb[0].mxu0 %v875
    %v2347 = vpop.f32.mrb[0].mxu0
    %v2348 = vadd.f32 0.0, %v2347
    %v2349 = vpop.f32.mrb[0].mxu0
    %2350 = vmatprep.mubr.f32.mxu0 0.0
    %2351 = vmatmul.mubr.f32.gmra.mrb[0].mxu0 %v877
    %v2352 = vpop.f32.mrb[0].mxu0
    %v2353 = vadd.f32 0.0, %v2352
    %v2354 = vpop.f32.mrb[0].mxu0
    %2355 = vmatprep.mubr.f32.mxu0 0.0
    %2356 = vmatmul.mubr.f32.gmra.mrb[0].mxu0 %v879
    %v2357 = vpop.f32.mrb[0].mxu0
    %v2358 = vadd.f32 0.0, %v2357
    %v2359 = vpop.f32.mrb[0].mxu0
    %2360 = vdwg.mxu0
    %v2361 = vadd.f32 %v2267, %v2343
    %v2362 = vadd.f32 %v2268, %v2348
    %v2363 = vadd.f32 %v2269, %v2353
    %v2364 = vadd.f32 %v2270, %v2358
    %s2365 = scalar_lea.vmem [#allocation6], 64
    %v2366 = vld [vmem:[%s2365] sm:$0xff]
    %v2367 = vld [vmem:[%s2365 + $0x8] sm:$0xff]
    %v2368 = vld [vmem:[%s2365 + $0x10] sm:$0xff]
    %v2369 = vld [vmem:[%s2365 + $0x18] sm:$0xff]
    %v2370 = vsel %vm284, %v1864, 0
    %v2372 = vsel %vm284, %v1865, 0
    %v2374 = vsel %vm284, %v1869, 0
    %v2376 = vsel %vm284, %v1871, 0
    %2378 = vmatprep.subr.mxu0 0.0
    %2379 = vmatpush1.msra.mxu0 %v2366
    %2380 = vmatprep.subr.mxu0 0.0
    %2381 = vmatpush1.msra.mxu0 %v2367
    %2382 = vmatprep.subr.mxu0 0.0
    %2383 = vmatpush1.msra.mxu0 %v2368
    %2384 = vmatprep.subr.mxu0 0.0
    %2385 = vmatpush1.msra.mxu0 %v2369
    %2386 = vmatprep.subr.mxu0 0.0
    %2387 = vmatpush1.msra.mxu0 0.0
    %2388 = vmatprep.subr.mxu0 0.0
    %2389 = vmatpush1.msra.mxu0 0.0
    %2390 = vmatprep.subr.mxu0 0.0
    %2391 = vmatpush1.msra.mxu0 0.0
    %2392 = vmatprep.subr.mxu0 0.0
    %2393 = vmatpush1.msra.mxu0 0.0
    %2394 = vmatprep.subr.mxu0 0.0
    %2395 = vmatpush1.msra.mxu0 0.0
    %2396 = vmatprep.subr.mxu0 0.0
    %2397 = vmatpush1.msra.mxu0 0.0
    %2398 = vmatprep.subr.mxu0 0.0
    %2399 = vmatpush1.msra.mxu0 0.0
    %2400 = vmatprep.subr.mxu0 0.0
    %2401 = vmatpush1.msra.mxu0 0.0
    %2402 = vmatprep.subr.mxu0 0.0
    %2403 = vmatpush1.msra.mxu0 0.0
    %2404 = vmatprep.subr.mxu0 0.0
    %2405 = vmatpush1.msra.mxu0 0.0
    %2406 = vmatprep.subr.mxu0 0.0
    %2407 = vmatpush1.msra.mxu0 0.0
    %2408 = vmatprep.subr.mxu0 0.0
    %2409 = vmatpush1.msra.mxu0 0.0
    %2410 = vmatprep.subr.mxu0 0.0
    %2411 = vmatpush1.msra.mxu0 0.0
    %2412 = vmatprep.subr.mxu0 0.0
    %2413 = vmatpush1.msra.mxu0 0.0
    %2414 = vmatprep.subr.mxu0 0.0
    %2415 = vmatpush1.msra.mxu0 0.0
    %2416 = vmatprep.subr.mxu0 0.0
    %2417 = vmatpush1.msra.mxu0 0.0
    %2418 = vmatprep.subr.mxu0 0.0
    %2419 = vmatpush1.msra.mxu0 0.0
    %2420 = vmatprep.subr.mxu0 0.0
    %2421 = vmatpush1.msra.mxu0 0.0
    %2422 = vmatprep.subr.mxu0 0.0
    %2423 = vmatpush1.msra.mxu0 0.0
    %2424 = vmatprep.subr.mxu0 0.0
    %2425 = vmatpush1.msra.mxu0 0.0
    %2426 = vmatprep.subr.mxu0 0.0
    %2427 = vmatpush1.msra.mxu0 0.0
    %2428 = vmatprep.subr.mxu0 0.0
    %2429 = vmatpush1.msra.mxu0 0.0
    %2430 = vmatprep.subr.mxu0 0.0
    %2431 = vmatpush1.msra.mxu0 0.0
    %2432 = vmatprep.subr.mxu0 0.0
    %2433 = vmatpush1.msra.mxu0 0.0
    %2434 = vmatprep.subr.mxu0 0.0
    %2435 = vmatpush1.msra.mxu0 0.0
    %2436 = vmatprep.subr.mxu0 0.0
    %2437 = vmatpush1.msra.mxu0 0.0
    %2438 = vmatprep.subr.mxu0 0.0
    %2439 = vmatpush1.msra.mxu0 0.0
    %2440 = vmatprep.subr.mxu0 0.0
    %2441 = vmatpush1.msra.mxu0 0.0
    %2442 = vmatprep.mubr.f32.mxu0 0.0
    %2443 = vmatmul.mubr.f32.gmra.mrb[0].mxu0 %v2370
    %v2444 = vpop.f32.mrb[0].mxu0
    %v2445 = vadd.f32 0.0, %v2444
    %v2446 = vpop.f32.mrb[0].mxu0
    %2447 = vmatprep.mubr.f32.mxu0 0.0
    %2448 = vmatmul.mubr.f32.gmra.mrb[0].mxu0 %v2372
    %v2449 = vpop.f32.mrb[0].mxu0
    %v2450 = vadd.f32 0.0, %v2449
    %v2451 = vpop.f32.mrb[0].mxu0
    %2452 = vmatprep.mubr.f32.mxu0 0.0
    %2453 = vmatmul.mubr.f32.gmra.mrb[0].mxu0 %v2374
    %v2454 = vpop.f32.mrb[0].mxu0
    %v2455 = vadd.f32 0.0, %v2454
    %v2456 = vpop.f32.mrb[0].mxu0
    %2457 = vmatprep.mubr.f32.mxu0 0.0
    %2458 = vmatmul.mubr.f32.gmra.mrb[0].mxu0 %v2376
    %v2459 = vpop.f32.mrb[0].mxu0
    %v2460 = vadd.f32 0.0, %v2459
    %v2461 = vpop.f32.mrb[0].mxu0
    %2462 = vdwg.mxu0
    %v2463 = vadd.f32 %v2361, %v2445
    %v2464 = vadd.f32 %v2362, %v2450
    %v2465 = vadd.f32 %v2363, %v2455
    %v2466 = vadd.f32 %v2364, %v2460
    %v2467 = vtanh.pop %v2463
    %v2468 = vtanh.pop %v2464
    %v2469 = vtanh.pop %v2465
    %v2470 = vtanh.pop %v2466
    %v2471 = vmul.f32 %v1685, %v88
    %v2472 = vmul.f32 %v1687, %v89
    %v2473 = vmul.f32 %v1689, %v90
    %v2474 = vmul.f32 %v1691, %v91
    %v2475 = vsub.f32 1.0, %v1685
    %v2476 = vsub.f32 1.0, %v1687
    %v2477 = vsub.f32 1.0, %v1689
    %v2478 = vsub.f32 1.0, %v1691
    %v2479 = vmul.f32 %v2475, %v2467
    %v2480 = vmul.f32 %v2476, %v2468
    %v2481 = vmul.f32 %v2477, %v2469
    %v2482 = vmul.f32 %v2478, %v2470
    %v2483 = vadd.f32 %v2471, %v2479
    %v2484 = vadd.f32 %v2472, %v2480
    %v2485 = vadd.f32 %v2473, %v2481
    %v2486 = vadd.f32 %v2474, %v2482
    %2487 = vst.msk [vmem:[%s12] sm:$0xff] %vm284, %v2483
    %2488 = vst.msk [vmem:[%s12 + $0x8] sm:$0xff] %vm284, %v2484
    %2489 = vst.msk [vmem:[%s12 + $0x10] sm:$0xff] %vm284, %v2485
    %2490 = vst.msk [vmem:[%s12 + $0x18] sm:$0xff] %vm284, %v2486
    // Predicated region
    $region62: #{dcgru_cell_forward.1} parent=1 // pred_check
      _
    $region63: #{dcgru_cell_forward.1} parent=1 // pred_check_branch
      %2492 = sbr.rel (0) target = $region65
    $region64: #{dcgru_cell_forward.1} parent=1 // pred_region
      _
    $region65: #{dcgru_cell_forward.1} parent=1 // pred_fallthru
      _
    // Predicated region
    $region66: #{dcgru_cell_forward.1} parent=1 // pred_check
      _
    $region67: #{dcgru_cell_forward.1} parent=1 // pred_check_branch
      %2494 = sbr.rel (0) target = $region69
    $region68: #{dcgru_cell_forward.1} parent=1 // pred_region
      _
    $region69: #{dcgru_cell_forward.1} parent=1 // pred_fallthru
      _
    %2495 = vsyncpa [#allocation3], 1
    %2496 = vsyncpa [#allocation5], 1

</llo_original>
